<compile_context>
chip_gen: v6e
topology: v6e:2x2x1
jax: 0.10.0
libtpu: 0.0.40
codegen_flags: <defaults>
</compile_context>

<pallas_src>
import functools

import jax
import jax.numpy as jnp
import numpy as np
from jax import lax
from jax.experimental import pallas as pl
from jax.experimental.pallas import tpu as pltpu

MXU_DTYPE = jnp.bfloat16          # MXU operand dtype; accumulation & softmax stay f32


# ------------------------------- Pallas kernel -------------------------------

def _attention_kernel(w_ref, x_ref, wqkv_ref, wp_ref, bp_ref, o_ref, *,
                      heads_per_group, head_dim, mxu_dtype):
    """Grid = (batch, head_group).  One batch row, one group of heads per step.

    w_ref    : (1,) i32 SMEM scalar-prefetch  — band half-width (w >= N-1 => no mask)
    x_ref    : (1, N, C) f32                  — resident across the group axis
    wqkv_ref : (1, C, 3*Hg*D) bf16            — [Qg | Kg | Vg], scale folded into Qg
    wp_ref   : (1, Hg*D, C) bf16              — this group's rows of the proj weight
    bp_ref   : (1, C) f32                     — proj bias
    o_ref    : (1, N, C) f32                  — lane-dense, accumulated across groups
    """
    g = pl.program_id(1)
    n, c = x_ref.shape[1], x_ref.shape[2]
    gw = heads_per_group * head_dim

    x = x_ref[0].astype(mxu_dtype)                                      # (N, C)

    # Fused QKV projection for this head group: one wide MXU matmul, one bf16 downcast.
    qkv = jnp.dot(x, wqkv_ref[0],
                  preferred_element_type=jnp.float32).astype(mxu_dtype)  # (N, 3*gw)

    # Band mask built in-kernel: get_attn_mask(N, w)[i, j] == 1  <=>  |i - j| <= w.
    w = w_ref[0]
    row = lax.broadcasted_iota(jnp.int32, (n, n), 0)
    col = lax.broadcasted_iota(jnp.int32, (n, n), 1)
    allowed = jnp.abs(row - col) <= w                                    # (N, N) bool

    pieces = []
    for hh in range(heads_per_group):                   # static unroll, Hg is small
        lo = hh * head_dim
        q_h = qkv[:, lo:lo + head_dim]                                   # (N, D) bf16
        k_h = qkv[:, gw + lo:gw + lo + head_dim]
        v_h = qkv[:, 2 * gw + lo:2 * gw + lo + head_dim]

        # scores = (q*scale) @ k^T   (scale already folded into the Q weights)
        s = lax.dot_general(q_h, k_h, (((1,), (1,)), ((), ())),
                            preferred_element_type=jnp.float32)          # (N, N) f32
        s = jnp.where(allowed, s, -1e9)                 # masked_fill(mask==0, -1e9)

        # Numerically-stable softmax in f32; reciprocal goes to the EUP slot.
        s = s - jnp.max(s, axis=-1, keepdims=True)
        e = jnp.exp(s)
        p = e * pl.reciprocal(jnp.sum(e, axis=-1, keepdims=True), approx=True)

        pieces.append(jnp.dot(p.astype(mxu_dtype), v_h,
                              preferred_element_type=jnp.float32))       # (N, D)

    # Deferred output projection: concat heads lane-dense, single (N,gw)@(gw,C) matmul.
    o_grp = jnp.concatenate(pieces, axis=-1).astype(mxu_dtype)           # (N, gw)
    partial = jnp.dot(o_grp, wp_ref[0],
                      preferred_element_type=jnp.float32)                # (N, C)

    @pl.when(g == 0)
    def _first_group():
        o_ref[0] = (partial + bp_ref[...]).astype(o_ref.dtype)

    @pl.when(g > 0)
    def _other_groups():
        o_ref[0] = o_ref[0] + partial.astype(o_ref.dtype)

    # TODO(synk): attn_drop / proj_drop are identity (rates are 0.0 in the reference).


# --------------------------------- Wrapper -----------------------------------

def make_attention_fn(num_heads, scale, num_groups=2, mxu_dtype=MXU_DTYPE):
    """Returns a jitted forward(x, qkv_w, proj_w, proj_b, w) -> (B, N, C).

    `w` is the band half-width (4/6/8/10 for the masked epochs); pass w >= N to disable
    masking.  A single compiled kernel covers every epoch.
    """

    @jax.jit
    def forward(x, qkv_w, proj_w, proj_b, w):
        B, N, C = x.shape
        H = num_heads
        D = C // H
        G = num_groups if H % num_groups == 0 else 1
        Hg = H // G
        gw = Hg * D

        # Per-group fused QKV slabs (C, 3*gw) = [Qg | Kg | Vg]; softmax scale folded
        # into the Q columns (weight-side constant fold, done where we cast anyway).
        qw = qkv_w[:, 0 * C:1 * C] * scale
        kw = qkv_w[:, 1 * C:2 * C]
        vw = qkv_w[:, 2 * C:3 * C]
        wqkv = jnp.stack(
            [jnp.concatenate([qw[:, g * gw:(g + 1) * gw],
                              kw[:, g * gw:(g + 1) * gw],
                              vw[:, g * gw:(g + 1) * gw]], axis=1)
             for g in range(G)], axis=0).astype(mxu_dtype)               # (G, C, 3*gw)
        wp = jnp.stack([proj_w[g * gw:(g + 1) * gw, :] for g in range(G)],
                       axis=0).astype(mxu_dtype)                         # (G, gw, C)
        bp = proj_b.reshape(1, C).astype(jnp.float32)
        w_arr = jnp.reshape(jnp.asarray(w, jnp.int32), (1,))

        kernel = functools.partial(_attention_kernel, heads_per_group=Hg,
                                   head_dim=D, mxu_dtype=mxu_dtype)
        grid_spec = pltpu.PrefetchScalarGridSpec(
            num_scalar_prefetch=1,
            grid=(B, G),
            in_specs=[
                pl.BlockSpec((1, N, C), lambda b, g, w_s: (b, 0, 0)),       # x (resident over g)
                pl.BlockSpec((1, C, 3 * gw), lambda b, g, w_s: (g, 0, 0)),  # fused QKV slab
                pl.BlockSpec((1, gw, C), lambda b, g, w_s: (g, 0, 0)),      # proj rows of group
                pl.BlockSpec((1, C), lambda b, g, w_s: (0, 0)),             # proj bias
            ],
            out_specs=pl.BlockSpec((1, N, C), lambda b, g, w_s: (b, 0, 0)),
        )
        return pl.pallas_call(
            kernel,
            grid_spec=grid_spec,
            out_shape=jax.ShapeDtypeStruct((B, N, C), jnp.float32),
            compiler_params=pltpu.CompilerParams(
                dimension_semantics=("parallel", "arbitrary")),
        )(w_arr, x.astype(jnp.float32), wqkv, wp, bp)

    return forward


# ----------------------- Reference (mirrors the PyTorch) ----------------------

def get_attn_mask_np(N, w):
    mask = np.zeros((N, N), np.float32)
    for i in range(N):
        if i <= w:
            mask[i, 0:i + w + 1] = 1
        elif N - i <= w:
            mask[i, i - w:N] = 1
        else:
            mask[i, i:i + w + 1] = 1
            mask[i, i - w:i] = 1
    return mask


def attention_ref(x, qkv_w, proj_w, proj_b, num_heads, scale, mask):
    """Pure-JAX f32 reference, literal transcription of Attention.forward."""
    B, N, C = x.shape
    D = C // num_heads
    qkv = x @ qkv_w                                                   # qkv_bias=False
    qkv = qkv.reshape(B, N, 3, num_heads, D).transpose(2, 0, 3, 1, 4)
    q, k, v = qkv[0], qkv[1], qkv[2]                                  # (B, H, N, D)
    attn = jnp.einsum('bhnd,bhmd->bhnm', q, k) * scale
    if mask is not None:
        attn = jnp.where(mask[None, None, :, :] == 0.0, -1e9, attn)
    attn = jax.nn.softmax(attn, axis=-1)
    out = jnp.einsum('bhnm,bhmd->bhnd', attn, v)
    out = out.transpose(0, 2, 1, 3).reshape(B, N, C)
    return out @ proj_w + proj_b


# ----------------------------------- Main -------------------------------------

if __name__ == "__main__":
    # Shapes consistent with the module: dim=128, num_heads=8, head_dim=16, seq N=64
    # (TransGAN passes is_mask = N for the masked stage).
    B, N, C, H = 2, 64, 128, 8
    head_dim = C // H
    scale = head_dim ** (-0.5)                 # qk_scale=None -> head_dim ** -0.5
    is_mask = N

    key = jax.random.PRNGKey(0)
    kx, kqkv, kproj, kb = jax.random.split(key, 4)
    x = jax.random.normal(kx, (B, N, C), jnp.float32)
    qkv_w = jax.random.normal(kqkv, (C, 3 * C), jnp.float32) * 0.02
    proj_w = jax.random.normal(kproj, (C, C), jnp.float32) * 0.02
    proj_b = jax.random.normal(kb, (C,), jnp.float32) * 0.02

    masks = {w: jnp.asarray(get_attn_mask_np(N, w)) for w in (4, 6, 8, 10)}

    fwd = make_attention_fn(H, scale)

    def epoch_to_window(epoch):
        """Python-side epoch branching, exactly as in the PyTorch forward."""
        if is_mask and epoch < 60:
            if epoch < 22:
                return 4
            elif epoch < 32:
                return 6
            elif epoch < 42:
                return 8
            else:
                return 10
        return N    # w >= N-1 => band covers everything => no mask

    def run(epoch):
        w = epoch_to_window(epoch)
        mask = masks[w] if w < N else None
        out = jax.block_until_ready(fwd(x, qkv_w, proj_w, proj_b, w))
        assert out.shape == (B, N, C), out.shape
        assert bool(jnp.all(jnp.isfinite(out)))
        ref = attention_ref(x, qkv_w, proj_w, proj_b, H, scale, mask)
        err = float(jnp.max(jnp.abs(out - ref)))
        tol = 2e-2 * float(jnp.max(jnp.abs(ref))) + 1e-4   # bf16-MXU tolerance
        assert err <= tol, (epoch, err, tol)
        return out

    run(10)    # epoch < 22  -> mask_4 path
    run(30)    # epoch < 32  -> mask_6 path
    run(50)    # 42 <= epoch < 60 -> mask_10 path
    run(80)    # epoch >= 60 -> no mask (same compiled kernel, w = N)
    print("KERNEL_OK")
</pallas_src>

<mosaic_0001>
module attributes {stable_mosaic.version = 11 : i64} {
  func.func @_attention_kernel(%arg0: i32, %arg1: i32, %arg2: memref<1xi32, #tpu.memory_space<smem>>, %arg3: memref<1x64x128xf32, #tpu.memory_space<vmem>>, %arg4: memref<1x128x192xbf16, #tpu.memory_space<vmem>>, %arg5: memref<1x64x128xbf16, #tpu.memory_space<vmem>>, %arg6: memref<1x128xf32, #tpu.memory_space<vmem>>, %arg7: memref<1x64x128xf32, #tpu.memory_space<vmem>>) attributes {dimension_semantics = [#tpu.dimension_semantics<parallel>, #tpu.dimension_semantics<arbitrary>], iteration_bounds = array<i64: 2, 2>, scalar_prefetch = 1 : i64, scratch_operands = 0 : i64, tpu.core_type = #tpu.core_type<tc>, window_params = [{transform_indices = @transform_0, window_bounds = array<i64: 1, 64, 128>}, {transform_indices = @transform_1, window_bounds = array<i64: 1, 128, 192>}, {transform_indices = @transform_2, window_bounds = array<i64: 1, 64, 128>}, {pipeline_mode = #tpu.pipeline_mode<synchronous>, transform_indices = @transform_3, window_bounds = array<i64: 1, 128>}, {transform_indices = @transform_4, window_bounds = array<i64: 1, 64, 128>}]} {
    %c0 = arith.constant 0 : index
    %c0_0 = arith.constant 0 : index
    %c0_1 = arith.constant 0 : index
    %0 = vector.load %arg3[%c0, %c0_0, %c0_1] : memref<1x64x128xf32, #tpu.memory_space<vmem>>, vector<1x64x128xf32>
    %1 = vector.shape_cast %0 : vector<1x64x128xf32> to vector<64x128xf32>
    %2 = arith.truncf %1 : vector<64x128xf32> to vector<64x128xbf16>
    %c0_2 = arith.constant 0 : index
    %c0_3 = arith.constant 0 : index
    %c0_4 = arith.constant 0 : index
    %3 = vector.load %arg4[%c0_2, %c0_3, %c0_4] : memref<1x128x192xbf16, #tpu.memory_space<vmem>>, vector<1x128x192xbf16>
    %4 = vector.shape_cast %3 : vector<1x128x192xbf16> to vector<128x192xbf16>
    %cst = arith.constant dense<0.000000e+00> : vector<64x192xf32>
    %5 = tpu.matmul %2, %4, %cst {dimension_numbers = #tpu.dot_dimension_numbers<[1], [0], [0], [1], [0, 0, 1, 1], [], []>} : vector<64x128xbf16>, vector<128x192xbf16>, vector<64x192xf32> -> vector<64x192xf32>
    %6 = arith.truncf %5 : vector<64x192xf32> to vector<64x192xbf16>
    %c0_5 = arith.constant 0 : index
    %7 = memref.load %arg2[%c0_5] : memref<1xi32, #tpu.memory_space<smem>>
    %8 = tpu.iota {dimensions = array<i32: 0>} : vector<64x64xi32>
    %9 = tpu.iota {dimensions = array<i32: 1>} : vector<64x64xi32>
    %10 = arith.subi %8, %9 : vector<64x64xi32>
    %11 = math.absi %10 : vector<64x64xi32>
    %12 = vector.broadcast %7 : i32 to vector<64x64xi32>
    %13 = arith.cmpi sle, %11, %12 : vector<64x64xi32>
    %14 = vector.extract_strided_slice %6 {offsets = [0, 0], sizes = [64, 16], strides = [1, 1]} : vector<64x192xbf16> to vector<64x16xbf16>
    %15 = vector.extract_strided_slice %6 {offsets = [0, 64], sizes = [64, 16], strides = [1, 1]} : vector<64x192xbf16> to vector<64x16xbf16>
    %16 = vector.extract_strided_slice %6 {offsets = [0, 128], sizes = [64, 16], strides = [1, 1]} : vector<64x192xbf16> to vector<64x16xbf16>
    %cst_6 = arith.constant dense<0.000000e+00> : vector<64x64xf32>
    %17 = tpu.matmul %14, %15, %cst_6 {dimension_numbers = #tpu.dot_dimension_numbers<[1], [1], [0], [0], [0, 0, 1, 0], [], []>} : vector<64x16xbf16>, vector<64x16xbf16>, vector<64x64xf32> -> vector<64x64xf32>
    %cst_7 = arith.constant -1.000000e+09 : f32
    %18 = vector.broadcast %cst_7 : f32 to vector<64x64xf32>
    %19 = arith.select %13, %17, %18 : vector<64x64xi1>, vector<64x64xf32>
    %cst_8 = arith.constant dense<0xFF800000> : vector<64xf32>
    %20 = vector.multi_reduction <maximumf>, %19, %cst_8 [1] : vector<64x64xf32> to vector<64xf32>
    %21 = vector.shape_cast %20 : vector<64xf32> to vector<64x1xf32>
    %22 = vector.broadcast %21 : vector<64x1xf32> to vector<64x64xf32>
    %23 = arith.subf %19, %22 : vector<64x64xf32>
    %24 = math.exp %23 : vector<64x64xf32>
    %cst_9 = arith.constant dense<0.000000e+00> : vector<64xf32>
    %25 = vector.multi_reduction <add>, %24, %cst_9 [1] : vector<64x64xf32> to vector<64xf32>
    %26 = vector.shape_cast %25 : vector<64xf32> to vector<64x1xf32>
    %27 = tpu.reciprocal %26 {approx = true} : vector<64x1xf32> -> vector<64x1xf32>
    %28 = vector.broadcast %27 : vector<64x1xf32> to vector<64x64xf32>
    %29 = arith.mulf %24, %28 : vector<64x64xf32>
    %30 = arith.truncf %29 : vector<64x64xf32> to vector<64x64xbf16>
    %cst_10 = arith.constant dense<0.000000e+00> : vector<64x16xf32>
    %31 = tpu.matmul %30, %16, %cst_10 {dimension_numbers = #tpu.dot_dimension_numbers<[1], [0], [0], [1], [0, 0, 1, 1], [], []>} : vector<64x64xbf16>, vector<64x16xbf16>, vector<64x16xf32> -> vector<64x16xf32>
    %32 = vector.extract_strided_slice %6 {offsets = [0, 16], sizes = [64, 16], strides = [1, 1]} : vector<64x192xbf16> to vector<64x16xbf16>
    %33 = vector.extract_strided_slice %6 {offsets = [0, 80], sizes = [64, 16], strides = [1, 1]} : vector<64x192xbf16> to vector<64x16xbf16>
    %34 = vector.extract_strided_slice %6 {offsets = [0, 144], sizes = [64, 16], strides = [1, 1]} : vector<64x192xbf16> to vector<64x16xbf16>
    %cst_11 = arith.constant dense<0.000000e+00> : vector<64x64xf32>
    %35 = tpu.matmul %32, %33, %cst_11 {dimension_numbers = #tpu.dot_dimension_numbers<[1], [1], [0], [0], [0, 0, 1, 0], [], []>} : vector<64x16xbf16>, vector<64x16xbf16>, vector<64x64xf32> -> vector<64x64xf32>
    %cst_12 = arith.constant -1.000000e+09 : f32
    %36 = vector.broadcast %cst_12 : f32 to vector<64x64xf32>
    %37 = arith.select %13, %35, %36 : vector<64x64xi1>, vector<64x64xf32>
    %cst_13 = arith.constant dense<0xFF800000> : vector<64xf32>
    %38 = vector.multi_reduction <maximumf>, %37, %cst_13 [1] : vector<64x64xf32> to vector<64xf32>
    %39 = vector.shape_cast %38 : vector<64xf32> to vector<64x1xf32>
    %40 = vector.broadcast %39 : vector<64x1xf32> to vector<64x64xf32>
    %41 = arith.subf %37, %40 : vector<64x64xf32>
    %42 = math.exp %41 : vector<64x64xf32>
    %cst_14 = arith.constant dense<0.000000e+00> : vector<64xf32>
    %43 = vector.multi_reduction <add>, %42, %cst_14 [1] : vector<64x64xf32> to vector<64xf32>
    %44 = vector.shape_cast %43 : vector<64xf32> to vector<64x1xf32>
    %45 = tpu.reciprocal %44 {approx = true} : vector<64x1xf32> -> vector<64x1xf32>
    %46 = vector.broadcast %45 : vector<64x1xf32> to vector<64x64xf32>
    %47 = arith.mulf %42, %46 : vector<64x64xf32>
    %48 = arith.truncf %47 : vector<64x64xf32> to vector<64x64xbf16>
    %cst_15 = arith.constant dense<0.000000e+00> : vector<64x16xf32>
    %49 = tpu.matmul %48, %34, %cst_15 {dimension_numbers = #tpu.dot_dimension_numbers<[1], [0], [0], [1], [0, 0, 1, 1], [], []>} : vector<64x64xbf16>, vector<64x16xbf16>, vector<64x16xf32> -> vector<64x16xf32>
    %50 = vector.extract_strided_slice %6 {offsets = [0, 32], sizes = [64, 16], strides = [1, 1]} : vector<64x192xbf16> to vector<64x16xbf16>
    %51 = vector.extract_strided_slice %6 {offsets = [0, 96], sizes = [64, 16], strides = [1, 1]} : vector<64x192xbf16> to vector<64x16xbf16>
    %52 = vector.extract_strided_slice %6 {offsets = [0, 160], sizes = [64, 16], strides = [1, 1]} : vector<64x192xbf16> to vector<64x16xbf16>
    %cst_16 = arith.constant dense<0.000000e+00> : vector<64x64xf32>
    %53 = tpu.matmul %50, %51, %cst_16 {dimension_numbers = #tpu.dot_dimension_numbers<[1], [1], [0], [0], [0, 0, 1, 0], [], []>} : vector<64x16xbf16>, vector<64x16xbf16>, vector<64x64xf32> -> vector<64x64xf32>
    %cst_17 = arith.constant -1.000000e+09 : f32
    %54 = vector.broadcast %cst_17 : f32 to vector<64x64xf32>
    %55 = arith.select %13, %53, %54 : vector<64x64xi1>, vector<64x64xf32>
    %cst_18 = arith.constant dense<0xFF800000> : vector<64xf32>
    %56 = vector.multi_reduction <maximumf>, %55, %cst_18 [1] : vector<64x64xf32> to vector<64xf32>
    %57 = vector.shape_cast %56 : vector<64xf32> to vector<64x1xf32>
    %58 = vector.broadcast %57 : vector<64x1xf32> to vector<64x64xf32>
    %59 = arith.subf %55, %58 : vector<64x64xf32>
    %60 = math.exp %59 : vector<64x64xf32>
    %cst_19 = arith.constant dense<0.000000e+00> : vector<64xf32>
    %61 = vector.multi_reduction <add>, %60, %cst_19 [1] : vector<64x64xf32> to vector<64xf32>
    %62 = vector.shape_cast %61 : vector<64xf32> to vector<64x1xf32>
    %63 = tpu.reciprocal %62 {approx = true} : vector<64x1xf32> -> vector<64x1xf32>
    %64 = vector.broadcast %63 : vector<64x1xf32> to vector<64x64xf32>
    %65 = arith.mulf %60, %64 : vector<64x64xf32>
    %66 = arith.truncf %65 : vector<64x64xf32> to vector<64x64xbf16>
    %cst_20 = arith.constant dense<0.000000e+00> : vector<64x16xf32>
    %67 = tpu.matmul %66, %52, %cst_20 {dimension_numbers = #tpu.dot_dimension_numbers<[1], [0], [0], [1], [0, 0, 1, 1], [], []>} : vector<64x64xbf16>, vector<64x16xbf16>, vector<64x16xf32> -> vector<64x16xf32>
    %68 = vector.extract_strided_slice %6 {offsets = [0, 48], sizes = [64, 16], strides = [1, 1]} : vector<64x192xbf16> to vector<64x16xbf16>
    %69 = vector.extract_strided_slice %6 {offsets = [0, 112], sizes = [64, 16], strides = [1, 1]} : vector<64x192xbf16> to vector<64x16xbf16>
    %70 = vector.extract_strided_slice %6 {offsets = [0, 176], sizes = [64, 16], strides = [1, 1]} : vector<64x192xbf16> to vector<64x16xbf16>
    %cst_21 = arith.constant dense<0.000000e+00> : vector<64x64xf32>
    %71 = tpu.matmul %68, %69, %cst_21 {dimension_numbers = #tpu.dot_dimension_numbers<[1], [1], [0], [0], [0, 0, 1, 0], [], []>} : vector<64x16xbf16>, vector<64x16xbf16>, vector<64x64xf32> -> vector<64x64xf32>
    %cst_22 = arith.constant -1.000000e+09 : f32
    %72 = vector.broadcast %cst_22 : f32 to vector<64x64xf32>
    %73 = arith.select %13, %71, %72 : vector<64x64xi1>, vector<64x64xf32>
    %cst_23 = arith.constant dense<0xFF800000> : vector<64xf32>
    %74 = vector.multi_reduction <maximumf>, %73, %cst_23 [1] : vector<64x64xf32> to vector<64xf32>
    %75 = vector.shape_cast %74 : vector<64xf32> to vector<64x1xf32>
    %76 = vector.broadcast %75 : vector<64x1xf32> to vector<64x64xf32>
    %77 = arith.subf %73, %76 : vector<64x64xf32>
    %78 = math.exp %77 : vector<64x64xf32>
    %cst_24 = arith.constant dense<0.000000e+00> : vector<64xf32>
    %79 = vector.multi_reduction <add>, %78, %cst_24 [1] : vector<64x64xf32> to vector<64xf32>
    %80 = vector.shape_cast %79 : vector<64xf32> to vector<64x1xf32>
    %81 = tpu.reciprocal %80 {approx = true} : vector<64x1xf32> -> vector<64x1xf32>
    %82 = vector.broadcast %81 : vector<64x1xf32> to vector<64x64xf32>
    %83 = arith.mulf %78, %82 : vector<64x64xf32>
    %84 = arith.truncf %83 : vector<64x64xf32> to vector<64x64xbf16>
    %cst_25 = arith.constant dense<0.000000e+00> : vector<64x16xf32>
    %85 = tpu.matmul %84, %70, %cst_25 {dimension_numbers = #tpu.dot_dimension_numbers<[1], [0], [0], [1], [0, 0, 1, 1], [], []>} : vector<64x64xbf16>, vector<64x16xbf16>, vector<64x16xf32> -> vector<64x16xf32>
    %86 = tpu.concatenate %31, %49, %67, %85 in 1 : vector<64x16xf32>, vector<64x16xf32>, vector<64x16xf32>, vector<64x16xf32> -> vector<64x64xf32>
    %87 = arith.truncf %86 : vector<64x64xf32> to vector<64x64xbf16>
    %c0_26 = arith.constant 0 : index
    %c0_27 = arith.constant 0 : index
    %c0_28 = arith.constant 0 : index
    %88 = vector.load %arg5[%c0_26, %c0_27, %c0_28] : memref<1x64x128xbf16, #tpu.memory_space<vmem>>, vector<1x64x128xbf16>
    %89 = vector.shape_cast %88 : vector<1x64x128xbf16> to vector<64x128xbf16>
    %cst_29 = arith.constant dense<0.000000e+00> : vector<64x128xf32>
    %90 = tpu.matmul %87, %89, %cst_29 {dimension_numbers = #tpu.dot_dimension_numbers<[1], [0], [0], [1], [0, 0, 1, 1], [], []>} : vector<64x64xbf16>, vector<64x128xbf16>, vector<64x128xf32> -> vector<64x128xf32>
    %c0_i32 = arith.constant 0 : i32
    %91 = arith.cmpi eq, %arg1, %c0_i32 : i32
    %92 = arith.extui %91 : i1 to i32
    %c0_i32_30 = arith.constant 0 : i32
    %93 = arith.cmpi ne, %92, %c0_i32_30 : i32
    scf.if %93 {
      %c0_33 = arith.constant 0 : index
      %c0_34 = arith.constant 0 : index
      %97 = vector.load %arg6[%c0_33, %c0_34] : memref<1x128xf32, #tpu.memory_space<vmem>>, vector<1x128xf32>
      %98 = vector.broadcast %97 : vector<1x128xf32> to vector<64x128xf32>
      %99 = arith.addf %90, %98 : vector<64x128xf32>
      %c0_35 = arith.constant 0 : index
      %c0_36 = arith.constant 0 : index
      %c0_37 = arith.constant 0 : index
      %100 = vector.load %arg7[%c0_35, %c0_36, %c0_37] : memref<1x64x128xf32, #tpu.memory_space<vmem>>, vector<1x64x128xf32>
      %101 = vector.shape_cast %100 : vector<1x64x128xf32> to vector<64x128xf32>
      %102 = vector.shape_cast %99 : vector<64x128xf32> to vector<1x64x128xf32>
      tpu.vector_store %arg7[%c0_35, %c0_36, %c0_37], %102 {strides = array<i32>} : memref<1x64x128xf32, #tpu.memory_space<vmem>>, vector<1x64x128xf32>,
    } else {
    }
    %c0_i32_31 = arith.constant 0 : i32
    %94 = arith.cmpi sgt, %arg1, %c0_i32_31 : i32
    %95 = arith.extui %94 : i1 to i32
    %c0_i32_32 = arith.constant 0 : i32
    %96 = arith.cmpi ne, %95, %c0_i32_32 : i32
    scf.if %96 {
      %c0_33 = arith.constant 0 : index
      %c0_34 = arith.constant 0 : index
      %c0_35 = arith.constant 0 : index
      %97 = vector.load %arg7[%c0_33, %c0_34, %c0_35] : memref<1x64x128xf32, #tpu.memory_space<vmem>>, vector<1x64x128xf32>
      %98 = vector.shape_cast %97 : vector<1x64x128xf32> to vector<64x128xf32>
      %99 = arith.addf %98, %90 : vector<64x128xf32>
      %c0_36 = arith.constant 0 : index
      %c0_37 = arith.constant 0 : index
      %c0_38 = arith.constant 0 : index
      %100 = vector.load %arg7[%c0_36, %c0_37, %c0_38] : memref<1x64x128xf32, #tpu.memory_space<vmem>>, vector<1x64x128xf32>
      %101 = vector.shape_cast %100 : vector<1x64x128xf32> to vector<64x128xf32>
      %102 = vector.shape_cast %99 : vector<64x128xf32> to vector<1x64x128xf32>
      tpu.vector_store %arg7[%c0_36, %c0_37, %c0_38], %102 {strides = array<i32>} : memref<1x64x128xf32, #tpu.memory_space<vmem>>, vector<1x64x128xf32>,
    } else {
    }
    return
  }
  func.func @transform_0(%arg0: i32, %arg1: i32, %arg2: memref<1xi32, #tpu.memory_space<smem>>) -> (i32, i32, i32) {
    %c0_i32 = arith.constant 0 : i32
    %c0_i32_0 = arith.constant 0 : i32
    %c0_i32_1 = arith.constant 0 : i32
    return %arg0, %c0_i32, %c0_i32_0 : i32, i32, i32
  }
  func.func @transform_1(%arg0: i32, %arg1: i32, %arg2: memref<1xi32, #tpu.memory_space<smem>>) -> (i32, i32, i32) {
    %c0_i32 = arith.constant 0 : i32
    %c0_i32_0 = arith.constant 0 : i32
    %c0_i32_1 = arith.constant 0 : i32
    return %arg1, %c0_i32, %c0_i32_0 : i32, i32, i32
  }
  func.func @transform_2(%arg0: i32, %arg1: i32, %arg2: memref<1xi32, #tpu.memory_space<smem>>) -> (i32, i32, i32) {
    %c0_i32 = arith.constant 0 : i32
    %c0_i32_0 = arith.constant 0 : i32
    %c0_i32_1 = arith.constant 0 : i32
    return %arg1, %c0_i32, %c0_i32_0 : i32, i32, i32
  }
  func.func @transform_3(%arg0: i32, %arg1: i32, %arg2: memref<1xi32, #tpu.memory_space<smem>>) -> (i32, i32) {
    %c0_i32 = arith.constant 0 : i32
    %c0_i32_0 = arith.constant 0 : i32
    %c0_i32_1 = arith.constant 0 : i32
    return %c0_i32, %c0_i32_0 : i32, i32
  }
  func.func @transform_4(%arg0: i32, %arg1: i32, %arg2: memref<1xi32, #tpu.memory_space<smem>>) -> (i32, i32, i32) {
    %c0_i32 = arith.constant 0 : i32
    %c0_i32_0 = arith.constant 0 : i32
    %c0_i32_1 = arith.constant 0 : i32
    return %arg0, %c0_i32, %c0_i32_0 : i32, i32, i32
  }
}

</mosaic_0001>

<llo_original>
// kernel: forward.1
$region0: #{forward.1}
  #allocation0 [shape = 'u32[]', space=smem, size = 0x4, offset = 0x4, fixed_abs, tag = 'smem constant byte address 0x4 - core index']
  #allocation1 [shape = 'u32[144,128]{1,0:T(1,128)}', space=vmem, size = 0x12000, scoped, tag = 'internal scratch']
  #allocation2 [shape = 's32[1]{0}', space=sflag, size = 0x4, scoped, tag = 'scoped memory for forward.1']
  #allocation3 [shape = 's32[1]{0:T(128)S(6)}', space=smem, size = 0x200, scoped, tag = 'prefetched SMEM operand 0']
  %s0 = inlined_call_operand.<no memory space> [shape: s32[1], index: 0, kind: input, shape index: {}]
  %s1 = inlined_call_operand.vmem [shape: f32[2,64,128], index: 1, kind: input, shape index: {}]
  %s2 = inlined_call_operand.vmem [shape: bf16[2,128,192], index: 2, kind: input, shape index: {}]
  %s3 = inlined_call_operand.vmem [shape: bf16[2,64,128], index: 3, kind: input, shape index: {}]
  %s4 = inlined_call_operand.vmem [shape: f32[1,128], index: 4, kind: input, shape index: {}]
  %s5 = inlined_call_operand.hbm [shape: f32[2,64,128], index: 5, kind: output, shape index: {}]
  %s6 = sld [smem:[#allocation0]]
  $region57: #{forward.1} parent=0
    _
  %s8 = ssub.s32 1, %s6
  %s9 = scalar_select 0, %s8, %s6
  %10 = sst [smem:[#allocation3]] %s0
  $region1: #{forward.1} parent=0
    #allocation4 [shape = 'u8[65536]{0}', space=vmem, size = 0x10000, scoped, tag = 'output window, operand 0']
    #allocation5 [shape = 's32[2]{0}', space=sflag, size = 0x8, scoped, tag = 'scoped memory for forward.1']
    %11 = vsyncpa [#allocation5], 0
    %s12 = scalar_lea.sflag [#allocation5], 1
    %13 = vsyncpa %s12, 0
    loop: start=0, step=1, limit=6
    $region2: #{forward.1} parent=1 // loop_pre_header
      _
    $region3: #{forward.1} parent=1 // loop_header
      %s15 = sphi 0, %s19
      %p16 = scmp.ge.s32.totalorder %s15, 6
      %s22 = sphi 0, %s34
      %s23 = sphi 0, %s30
      %s24 = sphi 0, %s22
      %s25 = sphi 0, %s23
      %s26 = sphi 0, %s24
      %s27 = sphi 0, %s25
      %s37 = sphi 0, %s39
      %s40 = sphi 0, %s37
      %s41 = sphi 0, %s40
      %s57 = sphi 0, %s41
      %s63 = sphi 0, %s65
      %s66 = sphi 0, %s63
      %s67 = sphi 0, %s66
      %s83 = sphi 0, %s67
      %s89 = sphi 0, %s91
      %s92 = sphi 0, %s89
      %s93 = sphi 0, %s92
      %s109 = sphi 0, %s93
      %s113 = sphi 0, %s113
      %s115 = sphi 0, %s113
      %s116 = sphi 0, %s115
      %s130 = sphi 0, %s116
      %s136 = sphi 0, %s138
      %s139 = sphi 0, %s136
      %s140 = sphi 0, %s139
      %s156 = sphi 0, %s140
    $region4: #{forward.1} parent=1 // loop_header_branch
      %18 = sbr.rel (%p16) target = $region8
    $region5: #{forward.1} parent=1 // loop_body
      %s20 = ssub.s32 %s15, 1
      %s21 = ssub.s32 %s15, 2
      %s28 = sadd.s32 1, %s23
      %p29 = scmp.ge.s32.totalorder %s28, 2
      %s30 = scalar_select %p29, 0, %s28
      %s31 = sadd.s32 1, %s22
      %s32 = scalar_select %p29, %s31, %s22
      %p33 = scmp.ge.s32.totalorder %s32, 2
      %s34 = scalar_select %p33, 0, %s32
      %s35 = ssub.s32 %s22, %s34
      %p36 = scmp.eq.s32.totalorder %s35, 0
      %s38 = sadd.s32 %s37, 1
      %s39 = scalar_select %p36, %s37, %s38
      %p42 = pneg %p36
      %p43 = scmp.eq.s32.totalorder %s15, 3
      %p44 = por %p42, %p43
      %p45 = scmp.ne.s32.totalorder %s37, %s40
      %p46 = scmp.eq.s32.totalorder %s15, 0
      %p47 = por %p45, %p46
      %p48 = scmp.ne.s32.totalorder %s37, %s40
      %p49 = scmp.eq.s32.totalorder %s20, 3
      %p50 = por %p48, %p49
      %p51 = scmp.ne.s32.totalorder %s40, %s41
      %p52 = scmp.eq.s32.totalorder %s20, 0
      %p53 = por %p51, %p52
      %p54 = scmp.ne.s32.totalorder %s40, %s41
      %p55 = scmp.eq.s32.totalorder %s21, 3
      %p56 = por %p54, %p55
      %p58 = scmp.ne.s32.totalorder %s41, %s57
      %p59 = scmp.eq.s32.totalorder %s21, 0
      %p60 = por %p58, %p59
      %s61 = ssub.s32 %s23, %s30
      %p62 = scmp.eq.s32.totalorder %s61, 0
      %s64 = sadd.s32 %s63, 1
      %s65 = scalar_select %p62, %s63, %s64
      %p68 = pneg %p62
      %p69 = scmp.eq.s32.totalorder %s15, 3
      %p70 = por %p68, %p69
      %p71 = scmp.ne.s32.totalorder %s63, %s66
      %p72 = scmp.eq.s32.totalorder %s15, 0
      %p73 = por %p71, %p72
      %p74 = scmp.ne.s32.totalorder %s63, %s66
      %p75 = scmp.eq.s32.totalorder %s20, 3
      %p76 = por %p74, %p75
      %p77 = scmp.ne.s32.totalorder %s66, %s67
      %p78 = scmp.eq.s32.totalorder %s20, 0
      %p79 = por %p77, %p78
      %p80 = scmp.ne.s32.totalorder %s66, %s67
      %p81 = scmp.eq.s32.totalorder %s21, 3
      %p82 = por %p80, %p81
      %p84 = scmp.ne.s32.totalorder %s67, %s83
      %p85 = scmp.eq.s32.totalorder %s21, 0
      %p86 = por %p84, %p85
      %s87 = ssub.s32 %s23, %s30
      %p88 = scmp.eq.s32.totalorder %s87, 0
      %s90 = sadd.s32 %s89, 1
      %s91 = scalar_select %p88, %s89, %s90
      %p94 = pneg %p88
      %p95 = scmp.eq.s32.totalorder %s15, 3
      %p96 = por %p94, %p95
      %p97 = scmp.ne.s32.totalorder %s89, %s92
      %p98 = scmp.eq.s32.totalorder %s15, 0
      %p99 = por %p97, %p98
      %p100 = scmp.ne.s32.totalorder %s89, %s92
      %p101 = scmp.eq.s32.totalorder %s20, 3
      %p102 = por %p100, %p101
      %p103 = scmp.ne.s32.totalorder %s92, %s93
      %p104 = scmp.eq.s32.totalorder %s20, 0
      %p105 = por %p103, %p104
      %p106 = scmp.ne.s32.totalorder %s92, %s93
      %p107 = scmp.eq.s32.totalorder %s21, 3
      %p108 = por %p106, %p107
      %p110 = scmp.ne.s32.totalorder %s93, %s109
      %p111 = scmp.eq.s32.totalorder %s21, 0
      %p112 = por %p110, %p111
      %s114 = sadd.s32 %s113, 1
      %p117 = scmp.eq.s32.totalorder %s15, 3
      %p118 = scmp.ne.s32.totalorder %s113, %s115
      %p119 = scmp.eq.s32.totalorder %s15, 0
      %p120 = por %p118, %p119
      %p121 = scmp.ne.s32.totalorder %s113, %s115
      %p122 = scmp.eq.s32.totalorder %s20, 3
      %p123 = por %p121, %p122
      %p124 = scmp.ne.s32.totalorder %s115, %s116
      %p125 = scmp.eq.s32.totalorder %s20, 0
      %p126 = por %p124, %p125
      %p127 = scmp.ne.s32.totalorder %s115, %s116
      %p128 = scmp.eq.s32.totalorder %s21, 3
      %p129 = por %p127, %p128
      %p131 = scmp.ne.s32.totalorder %s116, %s130
      %p132 = scmp.eq.s32.totalorder %s21, 0
      %p133 = por %p131, %p132
      %s134 = ssub.s32 %s22, %s34
      %p135 = scmp.eq.s32.totalorder %s134, 0
      %s137 = sadd.s32 %s136, 1
      %s138 = scalar_select %p135, %s136, %s137
      %p141 = pneg %p135
      %p142 = scmp.eq.s32.totalorder %s15, 3
      %p143 = por %p141, %p142
      %p144 = scmp.ne.s32.totalorder %s136, %s139
      %p145 = scmp.eq.s32.totalorder %s15, 0
      %p146 = por %p144, %p145
      %p147 = scmp.ne.s32.totalorder %s136, %s139
      %p148 = scmp.eq.s32.totalorder %s20, 3
      %p149 = por %p147, %p148
      %p150 = scmp.ne.s32.totalorder %s139, %s140
      %p151 = scmp.eq.s32.totalorder %s20, 0
      %p152 = por %p150, %p151
      %p153 = scmp.ne.s32.totalorder %s139, %s140
      %p154 = scmp.eq.s32.totalorder %s21, 3
      %p155 = por %p153, %p154
      %p157 = scmp.ne.s32.totalorder %s140, %s156
      %p158 = scmp.eq.s32.totalorder %s21, 0
      %p159 = por %p157, %p158
      %p160 = scmp.le.s32.totalorder 1, %s15
      %p161 = scmp.lt.s32.totalorder %s15, 5
      %p162 = pnand %p160, %p161
      %p163 = pneg %p162
      // Predicated region
      $region9: #{forward.1} parent=5 // pred_check
        _
      $region10: #{forward.1} parent=5 // pred_check_branch
        %165 = sbr.rel (%p162) target = $region12
      $region11: #{forward.1} parent=5 // pred_region
        %s166 = ssub.s32 %s15, 1
        // Predicated region
        $region13: #{forward.1} parent=11 // pred_check
          %p167 = pneg %p126
        $region14: #{forward.1} parent=11 // pred_check_branch
          %169 = sbr.rel (%p167) target = $region16
        $region15: #{forward.1} parent=11 // pred_region
          _
        $region16: #{forward.1} parent=11 // pred_fallthru
          _
      $region12: #{forward.1} parent=5 // pred_fallthru
        _
      %p170 = scmp.lt.s32.totalorder %s15, 4
      // Predicated region
      $region17: #{forward.1} parent=5 // pred_check
        %p171 = pneg %p170
      $region18: #{forward.1} parent=5 // pred_check_branch
        %173 = sbr.rel (%p171) target = $region20
      $region19: #{forward.1} parent=5 // pred_region
        // Predicated region
        $region21: #{forward.1} parent=19 // pred_check
          %p174 = pneg %p47
        $region22: #{forward.1} parent=19 // pred_check_branch
          %176 = sbr.rel (%p174) target = $region24
        $region23: #{forward.1} parent=19 // pred_region
          %p177 = scmp.lt.s32.totalorder %s22, 1
          %s178 = scalar_select %p177, %s22, 1
          %s179 = smul.addr %s178, 8
          %s180 = smul.addr %s179, 8
          %s181 = scalar_lea.vmem %s1, %s180
        $region24: #{forward.1} parent=19 // pred_fallthru
          _
        // Predicated region
        $region25: #{forward.1} parent=19 // pred_check
          %p182 = pneg %p73
        $region26: #{forward.1} parent=19 // pred_check_branch
          %184 = sbr.rel (%p182) target = $region28
        $region27: #{forward.1} parent=19 // pred_region
          %p185 = scmp.lt.s32.totalorder %s23, 1
          %s186 = scalar_select %p185, %s23, 1
          %s187 = smul.addr %s186, 32
          %s188 = smul.addr %s187, 4
          %s189 = scalar_lea.vmem %s2, %s188
        $region28: #{forward.1} parent=19 // pred_fallthru
          _
        // Predicated region
        $region29: #{forward.1} parent=19 // pred_check
          %p190 = pneg %p99
        $region30: #{forward.1} parent=19 // pred_check_branch
          %192 = sbr.rel (%p190) target = $region32
        $region31: #{forward.1} parent=19 // pred_region
          %p193 = scmp.lt.s32.totalorder %s23, 1
          %s194 = scalar_select %p193, %s23, 1
          %s195 = smul.addr %s194, 8
          %s196 = smul.addr %s195, 4
          %s197 = scalar_lea.vmem %s3, %s196
        $region32: #{forward.1} parent=19 // pred_fallthru
          _
      $region20: #{forward.1} parent=5 // pred_fallthru
        _
      %p198 = scmp.le.s32.totalorder 1, %s15
      %p199 = scmp.lt.s32.totalorder %s15, 5
      %p200 = pnand %p198, %p199
      %p201 = pneg %p200
      // Predicated region
      $region33: #{forward.1} parent=5 // pred_check
        _
      $region34: #{forward.1} parent=5 // pred_check_branch
        %203 = sbr.rel (%p200) target = $region36
      $region35: #{forward.1} parent=5 // pred_region
        %s204 = ssub.s32 %s15, 1
        %p205 = scmp.lt.s32.totalorder %s24, 1
        %s206 = scalar_select %p205, %s24, 1
        %s207 = smul.addr %s206, 8
        %s208 = smul.addr %s207, 8
        %s209 = scalar_lea.vmem %s1, %s208
        %p210 = pneg %p53
        %p211 = pneg %p50
        %p212 = scmp.lt.s32.totalorder %s25, 1
        %s213 = scalar_select %p212, %s25, 1
        %s214 = smul.addr %s213, 32
        %s215 = smul.addr %s214, 4
        %s216 = scalar_lea.vmem %s2, %s215
        %p217 = pneg %p79
        %p218 = pneg %p76
        %p219 = scmp.lt.s32.totalorder %s25, 1
        %s220 = scalar_select %p219, %s25, 1
        %s221 = smul.addr %s220, 8
        %s222 = smul.addr %s221, 4
        %s223 = scalar_lea.vmem %s3, %s222
        %p224 = pneg %p105
        %p225 = pneg %p102
        %p226 = pneg %p126
        %p227 = pneg %p123
        %p228 = pneg %p152
        %p229 = pneg %p149
        %s230 = sand.u32 %s139, 1
        %s231 = scalar_lea.sflag [#allocation5], %s230
        %s232 = sand.u32 %s139, 1
        %s233 = smul.addr %s232, 64
        %s234 = scalar_lea.vmem [#allocation4], %s233
        %p235 = scmp.lt.s32.totalorder %s24, 1
        %s236 = scalar_select %p235, %s24, 1
        %s237 = smul.addr %s236, 8
        %s238 = smul.addr %s237, 8
        %s239 = scalar_lea.vmem %s1, %s238
        %p240 = scmp.lt.s32.totalorder %s25, 1
        %s241 = scalar_select %p240, %s25, 1
        %s242 = smul.addr %s241, 32
        %s243 = smul.addr %s242, 4
        %s244 = scalar_lea.vmem %s2, %s243
        %p245 = scmp.lt.s32.totalorder %s25, 1
        %s246 = scalar_select %p245, %s25, 1
        %s247 = smul.addr %s246, 8
        %s248 = smul.addr %s247, 4
        %s249 = scalar_lea.vmem %s3, %s248
        %v251 = vld [vmem:[%s239] sm:$0xff]
        %v252 = vld [vmem:[%s239 + $0x8] sm:$0xff]
        %v253 = vld [vmem:[%s239 + $0x10] sm:$0xff]
        %v254 = vld [vmem:[%s239 + $0x18] sm:$0xff]
        %v255 = vld [vmem:[%s239 + $0x20] sm:$0xff]
        %v256 = vld [vmem:[%s239 + $0x28] sm:$0xff]
        %v257 = vld [vmem:[%s239 + $0x30] sm:$0xff]
        %v258 = vld [vmem:[%s239 + $0x38] sm:$0xff]
        %v259 = vpack.c.bf16 %v252, %v251
        %v260 = vpack.c.bf16 %v254, %v253
        %v261 = vpack.c.bf16 %v256, %v255
        %v262 = vpack.c.bf16 %v258, %v257
        %v263 = vld [vmem:[%s244] sm:$0xff]
        %v264 = vld [vmem:[%s244 + $0x8] sm:$0xff]
        %v265 = vld [vmem:[%s244 + $0x10] sm:$0xff]
        %v266 = vld [vmem:[%s244 + $0x18] sm:$0xff]
        %v267 = vld [vmem:[%s244 + $0x20] sm:$0xff]
        %v268 = vld [vmem:[%s244 + $0x28] sm:$0xff]
        %v269 = vld [vmem:[%s244 + $0x30] sm:$0xff]
        %v270 = vld [vmem:[%s244 + $0x38] sm:$0xff]
        %v271 = vld [vmem:[%s244 + $0x40] sm:$0xff]
        %v272 = vld [vmem:[%s244 + $0x48] sm:$0xff]
        %v273 = vld [vmem:[%s244 + $0x50] sm:$0xff]
        %v274 = vld [vmem:[%s244 + $0x58] sm:$0xff]
        %v275 = vld [vmem:[%s244 + $0x60] sm:$0xff]
        %v276 = vld [vmem:[%s244 + $0x68] sm:$0xff]
        %v277 = vld [vmem:[%s244 + $0x70] sm:$0xff]
        %v278 = vld [vmem:[%s244 + $0x78] sm:$0xff]
        %v295 = vunpack.c.l.b16 %v263
        %v296 = vunpack.c.h.b16 %v263
        %v297 = vunpack.c.l.b16 %v264
        %v298 = vunpack.c.h.b16 %v264
        %v299 = vunpack.c.l.b16 %v265
        %v300 = vunpack.c.h.b16 %v265
        %v301 = vunpack.c.l.b16 %v266
        %v302 = vunpack.c.h.b16 %v266
        %v303 = vunpack.c.l.b16 %v267
        %v304 = vunpack.c.h.b16 %v267
        %v305 = vunpack.c.l.b16 %v268
        %v306 = vunpack.c.h.b16 %v268
        %v307 = vunpack.c.l.b16 %v269
        %v308 = vunpack.c.h.b16 %v269
        %v309 = vunpack.c.l.b16 %v270
        %v310 = vunpack.c.h.b16 %v270
        %v311 = vunpack.c.l.b16 %v271
        %v312 = vunpack.c.h.b16 %v271
        %v313 = vunpack.c.l.b16 %v272
        %v314 = vunpack.c.h.b16 %v272
        %v315 = vunpack.c.l.b16 %v273
        %v316 = vunpack.c.h.b16 %v273
        %v317 = vunpack.c.l.b16 %v274
        %v318 = vunpack.c.h.b16 %v274
        %v319 = vunpack.c.l.b16 %v275
        %v320 = vunpack.c.h.b16 %v275
        %v321 = vunpack.c.l.b16 %v276
        %v322 = vunpack.c.h.b16 %v276
        %v323 = vunpack.c.l.b16 %v277
        %v324 = vunpack.c.h.b16 %v277
        %v325 = vunpack.c.l.b16 %v278
        %v326 = vunpack.c.h.b16 %v278
        %v327 = vpack.c.b16 %v297, %v295
        %v328 = vpack.c.b16 %v298, %v296
        %v329 = vpack.c.b16 %v301, %v299
        %v330 = vpack.c.b16 %v302, %v300
        %v331 = vpack.c.b16 %v305, %v303
        %v332 = vpack.c.b16 %v306, %v304
        %v333 = vpack.c.b16 %v309, %v307
        %v334 = vpack.c.b16 %v310, %v308
        %v335 = vpack.c.b16 %v313, %v311
        %v336 = vpack.c.b16 %v314, %v312
        %v337 = vpack.c.b16 %v317, %v315
        %v338 = vpack.c.b16 %v318, %v316
        %v339 = vpack.c.b16 %v321, %v319
        %v340 = vpack.c.b16 %v322, %v320
        %v341 = vpack.c.b16 %v325, %v323
        %v342 = vpack.c.b16 %v326, %v324
        %359 = vmatprep.subr.bf16.mxu0 %v342
        %360 = vmatpush1.bf16.msra.mxu0 %v341
        %361 = vmatprep.subr.bf16.mxu0 %v340
        %362 = vmatpush1.bf16.msra.mxu0 %v339
        %363 = vmatprep.subr.bf16.mxu0 %v338
        %364 = vmatpush1.bf16.msra.mxu0 %v337
        %365 = vmatprep.subr.bf16.mxu0 %v336
        %366 = vmatpush1.bf16.msra.mxu0 %v335
        %367 = vmatprep.subr.bf16.mxu0 %v334
        %368 = vmatpush1.bf16.msra.mxu0 %v333
        %369 = vmatprep.subr.bf16.mxu0 %v332
        %370 = vmatpush1.bf16.msra.mxu0 %v331
        %371 = vmatprep.subr.bf16.mxu0 %v330
        %372 = vmatpush1.bf16.msra.mxu0 %v329
        %373 = vmatprep.subr.bf16.mxu0 %v328
        %374 = vmatpush1.bf16.msra.mxu0 %v327
        %375 = vmatprep.subr.bf16.mxu0 0
        %376 = vmatpush2.bf16.msra.mxu0 0
        %377 = vmatprep.subr.bf16.mxu0 0
        %378 = vmatpush2.bf16.msra.mxu0 0
        %379 = vmatprep.subr.bf16.mxu0 0
        %380 = vmatpush2.bf16.msra.mxu0 0
        %381 = vmatprep.subr.bf16.mxu0 0
        %382 = vmatpush2.bf16.msra.mxu0 0
        %383 = vmatprep.subr.bf16.mxu0 0
        %384 = vmatpush2.bf16.msra.mxu0 0
        %385 = vmatprep.subr.bf16.mxu0 0
        %386 = vmatpush2.bf16.msra.mxu0 0
        %387 = vmatprep.subr.bf16.mxu0 0
        %388 = vmatpush2.bf16.msra.mxu0 0
        %389 = vmatprep.subr.bf16.mxu0 0
        %390 = vmatpush2.bf16.msra.mxu0 0
        %391 = vmatprep.mubr.bf16.mxu0 0
        %392 = vmatmul.mubr.bf16.gmra.mxu0 %v259
        %v393 = vpop.f32.mrf.mxu0
        %v394 = vadd.f32 0.0, %v393
        %v395 = vpop.f32.mrf.mxu0
        %v396 = vadd.f32 0.0, %v395
        %v397 = vpop.f32.mrf.mxu0
        %v398 = vadd.f32 0.0, %v397
        %v399 = vpop.f32.mrf.mxu0
        %v400 = vadd.f32 0.0, %v399
        %401 = vmatprep.mubr.bf16.mxu0 0
        %402 = vmatmul.mubr.bf16.gmra.mxu0 %v260
        %v403 = vpop.f32.mrf.mxu0
        %v404 = vadd.f32 0.0, %v403
        %v405 = vpop.f32.mrf.mxu0
        %v406 = vadd.f32 0.0, %v405
        %v407 = vpop.f32.mrf.mxu0
        %v408 = vadd.f32 0.0, %v407
        %v409 = vpop.f32.mrf.mxu0
        %v410 = vadd.f32 0.0, %v409
        %411 = vmatprep.mubr.bf16.mxu0 0
        %412 = vmatmul.mubr.bf16.gmra.mxu0 %v261
        %v413 = vpop.f32.mrf.mxu0
        %v414 = vadd.f32 0.0, %v413
        %v415 = vpop.f32.mrf.mxu0
        %v416 = vadd.f32 0.0, %v415
        %v417 = vpop.f32.mrf.mxu0
        %v418 = vadd.f32 0.0, %v417
        %v419 = vpop.f32.mrf.mxu0
        %v420 = vadd.f32 0.0, %v419
        %421 = vmatprep.mubr.bf16.mxu0 0
        %422 = vmatmul.mubr.bf16.gmra.mxu0 %v262
        %v423 = vpop.f32.mrf.mxu0
        %v424 = vadd.f32 0.0, %v423
        %v425 = vpop.f32.mrf.mxu0
        %v426 = vadd.f32 0.0, %v425
        %v427 = vpop.f32.mrf.mxu0
        %v428 = vadd.f32 0.0, %v427
        %v429 = vpop.f32.mrf.mxu0
        %v430 = vadd.f32 0.0, %v429
        %431 = vdwg.mxu0
        %v432 = vpack.c.bf16 %v398, %v394
        %v433 = vpack.c.bf16 %v400, %v396
        %v434 = vpack.c.bf16 %v408, %v404
        %v435 = vpack.c.bf16 %v410, %v406
        %v436 = vpack.c.bf16 %v418, %v414
        %v437 = vpack.c.bf16 %v420, %v416
        %v438 = vpack.c.bf16 %v428, %v424
        %v439 = vpack.c.bf16 %v430, %v426
        %s440 = sld [smem:[#allocation3]]
        %v441 = vlaneseq
        %v442 = vshrl.u32 %v441, 7
        %v443 = vadd.s32 %v442, 8
        %v444 = vadd.s32 %v442, 16
        %v445 = vadd.s32 %v442, 24
        %v446 = vadd.s32 %v442, 32
        %v447 = vadd.s32 %v442, 40
        %v448 = vadd.s32 %v442, 48
        %v449 = vadd.s32 %v442, 56
        %v450 = vlaneseq
        %v451 = vand.u32 %v450, 127
        %v452 = vsub.s32 %v442, %v451
        %v453 = vsub.s32 %v443, %v451
        %v454 = vsub.s32 %v444, %v451
        %v455 = vsub.s32 %v445, %v451
        %v456 = vsub.s32 %v446, %v451
        %v457 = vsub.s32 %v447, %v451
        %v458 = vsub.s32 %v448, %v451
        %v459 = vsub.s32 %v449, %v451
        %vm460 = vcmp.lt.s32.totalorder %v452, 0
        %v461 = vsub.s32 0, %v452
        %v462 = vsel %vm460, %v461, %v452
        %vm463 = vcmp.lt.s32.totalorder %v453, 0
        %v464 = vsub.s32 0, %v453
        %v465 = vsel %vm463, %v464, %v453
        %vm466 = vcmp.lt.s32.totalorder %v454, 0
        %v467 = vsub.s32 0, %v454
        %v468 = vsel %vm466, %v467, %v454
        %vm469 = vcmp.lt.s32.totalorder %v455, 0
        %v470 = vsub.s32 0, %v455
        %v471 = vsel %vm469, %v470, %v455
        %vm472 = vcmp.lt.s32.totalorder %v456, 0
        %v473 = vsub.s32 0, %v456
        %v474 = vsel %vm472, %v473, %v456
        %vm475 = vcmp.lt.s32.totalorder %v457, 0
        %v476 = vsub.s32 0, %v457
        %v477 = vsel %vm475, %v476, %v457
        %vm478 = vcmp.lt.s32.totalorder %v458, 0
        %v479 = vsub.s32 0, %v458
        %v480 = vsel %vm478, %v479, %v458
        %vm481 = vcmp.lt.s32.totalorder %v459, 0
        %v482 = vsub.s32 0, %v459
        %v483 = vsel %vm481, %v482, %v459
        %v484 = vstv %s440
        %vm485 = vcmp.le.s32.totalorder %v462, %v484
        %vm486 = vcmp.le.s32.totalorder %v465, %v484
        %vm487 = vcmp.le.s32.totalorder %v468, %v484
        %vm488 = vcmp.le.s32.totalorder %v471, %v484
        %vm489 = vcmp.le.s32.totalorder %v474, %v484
        %vm490 = vcmp.le.s32.totalorder %v477, %v484
        %vm491 = vcmp.le.s32.totalorder %v480, %v484
        %vm492 = vcmp.le.s32.totalorder %v483, %v484
        %497 = vrot.lane.b32.xlu0 %v432, 64
        %v498 = vpop.permute.xlu0 %497
        %499 = vrot.lane.b32.xlu0 %v434, 64
        %v500 = vpop.permute.xlu0 %499
        %501 = vrot.lane.b32.xlu0 %v436, 64
        %v502 = vpop.permute.xlu0 %501
        %503 = vrot.lane.b32.xlu0 %v438, 64
        %v504 = vpop.permute.xlu0 %503
        %vm505 = vcmask 130048
        %v507 = vsel %vm505, %v432, 0
        %v510 = vsel %vm505, %v434, 0
        %v513 = vsel %vm505, %v436, 0
        %v516 = vsel %vm505, %v438, 0
        %v519 = vsel %vm505, %v498, 0
        %v522 = vsel %vm505, %v500, 0
        %v525 = vsel %vm505, %v502, 0
        %v528 = vsel %vm505, %v504, 0
        %530 = vmatprep.subr.bf16.mxu0 0
        %531 = vmatpush1.bf16.xpose.msra.mxu0 0
        %532 = vmatprep.subr.bf16.mxu0 0
        %533 = vmatpush1.bf16.xpose.msra.mxu0 0
        %534 = vmatprep.subr.bf16.mxu0 0
        %535 = vmatpush1.bf16.xpose.msra.mxu0 0
        %536 = vmatprep.subr.bf16.mxu0 0
        %537 = vmatpush1.bf16.xpose.msra.mxu0 0
        %538 = vmatprep.subr.bf16.mxu0 0
        %539 = vmatpush1.bf16.xpose.msra.mxu0 %v528
        %540 = vmatprep.subr.bf16.mxu0 0
        %541 = vmatpush1.bf16.xpose.msra.mxu0 %v525
        %542 = vmatprep.subr.bf16.mxu0 0
        %543 = vmatpush1.bf16.xpose.msra.mxu0 %v522
        %544 = vmatprep.subr.bf16.mxu0 0
        %545 = vmatpush1.bf16.xpose.msra.mxu0 %v519
        %546 = vmatprep.subr.bf16.mxu0 0
        %547 = vmatpush2.bf16.xpose.msra.mxu0 0
        %548 = vmatprep.subr.bf16.mxu0 0
        %549 = vmatpush2.bf16.xpose.msra.mxu0 0
        %550 = vmatprep.subr.bf16.mxu0 0
        %551 = vmatpush2.bf16.xpose.msra.mxu0 0
        %552 = vmatprep.subr.bf16.mxu0 0
        %553 = vmatpush2.bf16.xpose.msra.mxu0 0
        %554 = vmatprep.subr.bf16.mxu0 0
        %555 = vmatpush2.bf16.xpose.msra.mxu0 0
        %556 = vmatprep.subr.bf16.mxu0 0
        %557 = vmatpush2.bf16.xpose.msra.mxu0 0
        %558 = vmatprep.subr.bf16.mxu0 0
        %559 = vmatpush2.bf16.xpose.msra.mxu0 0
        %560 = vmatprep.subr.bf16.mxu0 0
        %561 = vmatpush2.bf16.xpose.msra.mxu0 0
        %562 = vmatprep.mubr.bf16.mxu0 0
        %563 = vmatmul.mubr.bf16.gmra.mxu0 %v507
        %v564 = vpop.f32.mrf.mxu0
        %v565 = vadd.f32 0.0, %v564
        %v566 = vpop.f32.mrf.mxu0
        %v567 = vpop.f32.mrf.mxu0
        %v568 = vadd.f32 0.0, %v567
        %v569 = vpop.f32.mrf.mxu0
        %570 = vmatprep.mubr.bf16.mxu0 0
        %571 = vmatmul.mubr.bf16.gmra.mxu0 %v510
        %v572 = vpop.f32.mrf.mxu0
        %v573 = vadd.f32 0.0, %v572
        %v574 = vpop.f32.mrf.mxu0
        %v575 = vpop.f32.mrf.mxu0
        %v576 = vadd.f32 0.0, %v575
        %v577 = vpop.f32.mrf.mxu0
        %578 = vmatprep.mubr.bf16.mxu0 0
        %579 = vmatmul.mubr.bf16.gmra.mxu0 %v513
        %v580 = vpop.f32.mrf.mxu0
        %v581 = vadd.f32 0.0, %v580
        %v582 = vpop.f32.mrf.mxu0
        %v583 = vpop.f32.mrf.mxu0
        %v584 = vadd.f32 0.0, %v583
        %v585 = vpop.f32.mrf.mxu0
        %586 = vmatprep.mubr.bf16.mxu0 0
        %587 = vmatmul.mubr.bf16.gmra.mxu0 %v516
        %v588 = vpop.f32.mrf.mxu0
        %v589 = vadd.f32 0.0, %v588
        %v590 = vpop.f32.mrf.mxu0
        %v591 = vpop.f32.mrf.mxu0
        %v592 = vadd.f32 0.0, %v591
        %v593 = vpop.f32.mrf.mxu0
        %594 = vdwg.mxu0
        %v595 = vsel %vm485, %v565, -1e+09
        %v596 = vsel %vm486, %v568, -1e+09
        %v597 = vsel %vm487, %v573, -1e+09
        %v598 = vsel %vm488, %v576, -1e+09
        %v599 = vsel %vm489, %v581, -1e+09
        %v600 = vsel %vm490, %v584, -1e+09
        %v601 = vsel %vm491, %v589, -1e+09
        %v602 = vsel %vm492, %v592, -1e+09
        %vm603 = vcmask 523264
        %v604 = vsel %vm603, %v595, -inf
        %605 = vmax.xlane.f32.xlu0 %v604
        %v606 = vpop.xlane.xlu0 %605
        %v607 = vsel %vm603, %v596, -inf
        %608 = vmax.xlane.f32.xlu0 %v607
        %v609 = vpop.xlane.xlu0 %608
        %v610 = vsel %vm603, %v597, -inf
        %611 = vmax.xlane.f32.xlu0 %v610
        %v612 = vpop.xlane.xlu0 %611
        %v613 = vsel %vm603, %v598, -inf
        %614 = vmax.xlane.f32.xlu0 %v613
        %v615 = vpop.xlane.xlu0 %614
        %v616 = vsel %vm603, %v599, -inf
        %617 = vmax.xlane.f32.xlu0 %v616
        %v618 = vpop.xlane.xlu0 %617
        %v619 = vsel %vm603, %v600, -inf
        %620 = vmax.xlane.f32.xlu0 %v619
        %v621 = vpop.xlane.xlu0 %620
        %v622 = vsel %vm603, %v601, -inf
        %623 = vmax.xlane.f32.xlu0 %v622
        %v624 = vpop.xlane.xlu0 %623
        %v625 = vsel %vm603, %v602, -inf
        %626 = vmax.xlane.f32.xlu0 %v625
        %v627 = vpop.xlane.xlu0 %626
        %v628 = vsub.f32 %v595, %v606
        %v629 = vsub.f32 %v596, %v609
        %v630 = vsub.f32 %v597, %v612
        %v631 = vsub.f32 %v598, %v615
        %v632 = vsub.f32 %v599, %v618
        %v633 = vsub.f32 %v600, %v621
        %v634 = vsub.f32 %v601, %v624
        %v635 = vsub.f32 %v602, %v627
        %v636 = vmul.f32 %v628, 1.442695
        %v637 = vpow.pop %v636
        %v638 = vmul.f32 %v629, 1.442695
        %v639 = vpow.pop %v638
        %v640 = vmul.f32 %v630, 1.442695
        %v641 = vpow.pop %v640
        %v642 = vmul.f32 %v631, 1.442695
        %v643 = vpow.pop %v642
        %v644 = vmul.f32 %v632, 1.442695
        %v645 = vpow.pop %v644
        %v646 = vmul.f32 %v633, 1.442695
        %v647 = vpow.pop %v646
        %v648 = vmul.f32 %v634, 1.442695
        %v649 = vpow.pop %v648
        %v650 = vmul.f32 %v635, 1.442695
        %v651 = vpow.pop %v650
        %v652 = vsel %vm603, %v637, 0.0
        %653 = vadd.xlane.f32.xlu0 %v652
        %v654 = vpop.xlane.xlu0 %653
        %v655 = vsel %vm603, %v639, 0.0
        %656 = vadd.xlane.f32.xlu0 %v655
        %v657 = vpop.xlane.xlu0 %656
        %v658 = vsel %vm603, %v641, 0.0
        %659 = vadd.xlane.f32.xlu0 %v658
        %v660 = vpop.xlane.xlu0 %659
        %v661 = vsel %vm603, %v643, 0.0
        %662 = vadd.xlane.f32.xlu0 %v661
        %v663 = vpop.xlane.xlu0 %662
        %v664 = vsel %vm603, %v645, 0.0
        %665 = vadd.xlane.f32.xlu0 %v664
        %v666 = vpop.xlane.xlu0 %665
        %v667 = vsel %vm603, %v647, 0.0
        %668 = vadd.xlane.f32.xlu0 %v667
        %v669 = vpop.xlane.xlu0 %668
        %v670 = vsel %vm603, %v649, 0.0
        %671 = vadd.xlane.f32.xlu0 %v670
        %v672 = vpop.xlane.xlu0 %671
        %v673 = vsel %vm603, %v651, 0.0
        %674 = vadd.xlane.f32.xlu0 %v673
        %v675 = vpop.xlane.xlu0 %674
        %v676 = vrcp.pop %v654
        %v677 = vrcp.pop %v657
        %v678 = vrcp.pop %v660
        %v679 = vrcp.pop %v663
        %v680 = vrcp.pop %v666
        %v681 = vrcp.pop %v669
        %v682 = vrcp.pop %v672
        %v683 = vrcp.pop %v675
        %v684 = vmul.f32 %v637, %v676
        %v685 = vmul.f32 %v639, %v677
        %v686 = vmul.f32 %v641, %v678
        %v687 = vmul.f32 %v643, %v679
        %v688 = vmul.f32 %v645, %v680
        %v689 = vmul.f32 %v647, %v681
        %v690 = vmul.f32 %v649, %v682
        %v691 = vmul.f32 %v651, %v683
        %v692 = vpack.c.bf16 %v685, %v684
        %v693 = vpack.c.bf16 %v687, %v686
        %v694 = vpack.c.bf16 %v689, %v688
        %v695 = vpack.c.bf16 %v691, %v690
        %v697 = vsel %vm603, %v692, 0
        %v700 = vsel %vm603, %v693, 0
        %v703 = vsel %vm603, %v694, 0
        %v706 = vsel %vm603, %v695, 0
        %708 = vmatprep.subr.bf16.mxu0 0
        %709 = vmatpush1.bf16.msra.mxu0 0
        %710 = vmatprep.subr.bf16.mxu0 0
        %711 = vmatpush1.bf16.msra.mxu0 0
        %712 = vmatprep.subr.bf16.mxu0 0
        %713 = vmatpush1.bf16.msra.mxu0 0
        %714 = vmatprep.subr.bf16.mxu0 0
        %715 = vmatpush1.bf16.msra.mxu0 0
        %716 = vmatprep.subr.bf16.mxu0 0
        %717 = vmatpush1.bf16.msra.mxu0 %v439
        %718 = vmatprep.subr.bf16.mxu0 0
        %719 = vmatpush1.bf16.msra.mxu0 %v437
        %720 = vmatprep.subr.bf16.mxu0 0
        %721 = vmatpush1.bf16.msra.mxu0 %v435
        %722 = vmatprep.subr.bf16.mxu0 0
        %723 = vmatpush1.bf16.msra.mxu0 %v433
        %724 = vmatprep.subr.bf16.mxu0 0
        %725 = vmatpush2.bf16.msra.mxu0 0
        %726 = vmatprep.subr.bf16.mxu0 0
        %727 = vmatpush2.bf16.msra.mxu0 0
        %728 = vmatprep.subr.bf16.mxu0 0
        %729 = vmatpush2.bf16.msra.mxu0 0
        %730 = vmatprep.subr.bf16.mxu0 0
        %731 = vmatpush2.bf16.msra.mxu0 0
        %732 = vmatprep.subr.bf16.mxu0 0
        %733 = vmatpush2.bf16.msra.mxu0 0
        %734 = vmatprep.subr.bf16.mxu0 0
        %735 = vmatpush2.bf16.msra.mxu0 0
        %736 = vmatprep.subr.bf16.mxu0 0
        %737 = vmatpush2.bf16.msra.mxu0 0
        %738 = vmatprep.subr.bf16.mxu0 0
        %739 = vmatpush2.bf16.msra.mxu0 0
        %740 = vmatprep.mubr.bf16.mxu0 0
        %741 = vmatmul.mubr.bf16.gmra.mxu0 %v697
        %v742 = vpop.f32.mrf.mxu0
        %v743 = vadd.f32 0.0, %v742
        %v744 = vpop.f32.mrf.mxu0
        %v745 = vpop.f32.mrf.mxu0
        %v746 = vadd.f32 0.0, %v745
        %v747 = vpop.f32.mrf.mxu0
        %748 = vmatprep.mubr.bf16.mxu0 0
        %749 = vmatmul.mubr.bf16.gmra.mxu0 %v700
        %v750 = vpop.f32.mrf.mxu0
        %v751 = vadd.f32 0.0, %v750
        %v752 = vpop.f32.mrf.mxu0
        %v753 = vpop.f32.mrf.mxu0
        %v754 = vadd.f32 0.0, %v753
        %v755 = vpop.f32.mrf.mxu0
        %756 = vmatprep.mubr.bf16.mxu0 0
        %757 = vmatmul.mubr.bf16.gmra.mxu0 %v703
        %v758 = vpop.f32.mrf.mxu0
        %v759 = vadd.f32 0.0, %v758
        %v760 = vpop.f32.mrf.mxu0
        %v761 = vpop.f32.mrf.mxu0
        %v762 = vadd.f32 0.0, %v761
        %v763 = vpop.f32.mrf.mxu0
        %764 = vmatprep.mubr.bf16.mxu0 0
        %765 = vmatmul.mubr.bf16.gmra.mxu0 %v706
        %v766 = vpop.f32.mrf.mxu0
        %v767 = vadd.f32 0.0, %v766
        %v768 = vpop.f32.mrf.mxu0
        %v769 = vpop.f32.mrf.mxu0
        %v770 = vadd.f32 0.0, %v769
        %v771 = vpop.f32.mrf.mxu0
        %772 = vdwg.mxu0
        %773 = vrot.lane.b32.xlu0 %v432, 112
        %v774 = vpop.permute.xlu0 %773
        %775 = vrot.lane.b32.xlu0 %v434, 112
        %v776 = vpop.permute.xlu0 %775
        %777 = vrot.lane.b32.xlu0 %v436, 112
        %v778 = vpop.permute.xlu0 %777
        %779 = vrot.lane.b32.xlu0 %v438, 112
        %v780 = vpop.permute.xlu0 %779
        %781 = vrot.lane.b32.xlu0 %v432, 48
        %v782 = vpop.permute.xlu0 %781
        %783 = vrot.lane.b32.xlu0 %v434, 48
        %v784 = vpop.permute.xlu0 %783
        %785 = vrot.lane.b32.xlu0 %v436, 48
        %v786 = vpop.permute.xlu0 %785
        %787 = vrot.lane.b32.xlu0 %v438, 48
        %v788 = vpop.permute.xlu0 %787
        %v790 = vsel %vm505, %v774, 0
        %v793 = vsel %vm505, %v776, 0
        %v796 = vsel %vm505, %v778, 0
        %v799 = vsel %vm505, %v780, 0
        %v802 = vsel %vm505, %v782, 0
        %v805 = vsel %vm505, %v784, 0
        %v808 = vsel %vm505, %v786, 0
        %v811 = vsel %vm505, %v788, 0
        %813 = vmatprep.subr.bf16.mxu0 0
        %814 = vmatpush1.bf16.xpose.msra.mxu0 0
        %815 = vmatprep.subr.bf16.mxu0 0
        %816 = vmatpush1.bf16.xpose.msra.mxu0 0
        %817 = vmatprep.subr.bf16.mxu0 0
        %818 = vmatpush1.bf16.xpose.msra.mxu0 0
        %819 = vmatprep.subr.bf16.mxu0 0
        %820 = vmatpush1.bf16.xpose.msra.mxu0 0
        %821 = vmatprep.subr.bf16.mxu0 0
        %822 = vmatpush1.bf16.xpose.msra.mxu0 %v811
        %823 = vmatprep.subr.bf16.mxu0 0
        %824 = vmatpush1.bf16.xpose.msra.mxu0 %v808
        %825 = vmatprep.subr.bf16.mxu0 0
        %826 = vmatpush1.bf16.xpose.msra.mxu0 %v805
        %827 = vmatprep.subr.bf16.mxu0 0
        %828 = vmatpush1.bf16.xpose.msra.mxu0 %v802
        %829 = vmatprep.subr.bf16.mxu0 0
        %830 = vmatpush2.bf16.xpose.msra.mxu0 0
        %831 = vmatprep.subr.bf16.mxu0 0
        %832 = vmatpush2.bf16.xpose.msra.mxu0 0
        %833 = vmatprep.subr.bf16.mxu0 0
        %834 = vmatpush2.bf16.xpose.msra.mxu0 0
        %835 = vmatprep.subr.bf16.mxu0 0
        %836 = vmatpush2.bf16.xpose.msra.mxu0 0
        %837 = vmatprep.subr.bf16.mxu0 0
        %838 = vmatpush2.bf16.xpose.msra.mxu0 0
        %839 = vmatprep.subr.bf16.mxu0 0
        %840 = vmatpush2.bf16.xpose.msra.mxu0 0
        %841 = vmatprep.subr.bf16.mxu0 0
        %842 = vmatpush2.bf16.xpose.msra.mxu0 0
        %843 = vmatprep.subr.bf16.mxu0 0
        %844 = vmatpush2.bf16.xpose.msra.mxu0 0
        %845 = vmatprep.mubr.bf16.mxu0 0
        %846 = vmatmul.mubr.bf16.gmra.mxu0 %v790
        %v847 = vpop.f32.mrf.mxu0
        %v848 = vadd.f32 0.0, %v847
        %v849 = vpop.f32.mrf.mxu0
        %v850 = vpop.f32.mrf.mxu0
        %v851 = vadd.f32 0.0, %v850
        %v852 = vpop.f32.mrf.mxu0
        %853 = vmatprep.mubr.bf16.mxu0 0
        %854 = vmatmul.mubr.bf16.gmra.mxu0 %v793
        %v855 = vpop.f32.mrf.mxu0
        %v856 = vadd.f32 0.0, %v855
        %v857 = vpop.f32.mrf.mxu0
        %v858 = vpop.f32.mrf.mxu0
        %v859 = vadd.f32 0.0, %v858
        %v860 = vpop.f32.mrf.mxu0
        %861 = vmatprep.mubr.bf16.mxu0 0
        %862 = vmatmul.mubr.bf16.gmra.mxu0 %v796
        %v863 = vpop.f32.mrf.mxu0
        %v864 = vadd.f32 0.0, %v863
        %v865 = vpop.f32.mrf.mxu0
        %v866 = vpop.f32.mrf.mxu0
        %v867 = vadd.f32 0.0, %v866
        %v868 = vpop.f32.mrf.mxu0
        %869 = vmatprep.mubr.bf16.mxu0 0
        %870 = vmatmul.mubr.bf16.gmra.mxu0 %v799
        %v871 = vpop.f32.mrf.mxu0
        %v872 = vadd.f32 0.0, %v871
        %v873 = vpop.f32.mrf.mxu0
        %v874 = vpop.f32.mrf.mxu0
        %v875 = vadd.f32 0.0, %v874
        %v876 = vpop.f32.mrf.mxu0
        %877 = vdwg.mxu0
        %v878 = vsel %vm485, %v848, -1e+09
        %v879 = vsel %vm486, %v851, -1e+09
        %v880 = vsel %vm487, %v856, -1e+09
        %v881 = vsel %vm488, %v859, -1e+09
        %v882 = vsel %vm489, %v864, -1e+09
        %v883 = vsel %vm490, %v867, -1e+09
        %v884 = vsel %vm491, %v872, -1e+09
        %v885 = vsel %vm492, %v875, -1e+09
        %v886 = vsel %vm603, %v878, -inf
        %887 = vmax.xlane.f32.xlu0 %v886
        %v888 = vpop.xlane.xlu0 %887
        %v889 = vsel %vm603, %v879, -inf
        %890 = vmax.xlane.f32.xlu0 %v889
        %v891 = vpop.xlane.xlu0 %890
        %v892 = vsel %vm603, %v880, -inf
        %893 = vmax.xlane.f32.xlu0 %v892
        %v894 = vpop.xlane.xlu0 %893
        %v895 = vsel %vm603, %v881, -inf
        %896 = vmax.xlane.f32.xlu0 %v895
        %v897 = vpop.xlane.xlu0 %896
        %v898 = vsel %vm603, %v882, -inf
        %899 = vmax.xlane.f32.xlu0 %v898
        %v900 = vpop.xlane.xlu0 %899
        %v901 = vsel %vm603, %v883, -inf
        %902 = vmax.xlane.f32.xlu0 %v901
        %v903 = vpop.xlane.xlu0 %902
        %v904 = vsel %vm603, %v884, -inf
        %905 = vmax.xlane.f32.xlu0 %v904
        %v906 = vpop.xlane.xlu0 %905
        %v907 = vsel %vm603, %v885, -inf
        %908 = vmax.xlane.f32.xlu0 %v907
        %v909 = vpop.xlane.xlu0 %908
        %v910 = vsub.f32 %v878, %v888
        %v911 = vsub.f32 %v879, %v891
        %v912 = vsub.f32 %v880, %v894
        %v913 = vsub.f32 %v881, %v897
        %v914 = vsub.f32 %v882, %v900
        %v915 = vsub.f32 %v883, %v903
        %v916 = vsub.f32 %v884, %v906
        %v917 = vsub.f32 %v885, %v909
        %v918 = vmul.f32 %v910, 1.442695
        %v919 = vpow.pop %v918
        %v920 = vmul.f32 %v911, 1.442695
        %v921 = vpow.pop %v920
        %v922 = vmul.f32 %v912, 1.442695
        %v923 = vpow.pop %v922
        %v924 = vmul.f32 %v913, 1.442695
        %v925 = vpow.pop %v924
        %v926 = vmul.f32 %v914, 1.442695
        %v927 = vpow.pop %v926
        %v928 = vmul.f32 %v915, 1.442695
        %v929 = vpow.pop %v928
        %v930 = vmul.f32 %v916, 1.442695
        %v931 = vpow.pop %v930
        %v932 = vmul.f32 %v917, 1.442695
        %v933 = vpow.pop %v932
        %v934 = vsel %vm603, %v919, 0.0
        %935 = vadd.xlane.f32.xlu0 %v934
        %v936 = vpop.xlane.xlu0 %935
        %v937 = vsel %vm603, %v921, 0.0
        %938 = vadd.xlane.f32.xlu0 %v937
        %v939 = vpop.xlane.xlu0 %938
        %v940 = vsel %vm603, %v923, 0.0
        %941 = vadd.xlane.f32.xlu0 %v940
        %v942 = vpop.xlane.xlu0 %941
        %v943 = vsel %vm603, %v925, 0.0
        %944 = vadd.xlane.f32.xlu0 %v943
        %v945 = vpop.xlane.xlu0 %944
        %v946 = vsel %vm603, %v927, 0.0
        %947 = vadd.xlane.f32.xlu0 %v946
        %v948 = vpop.xlane.xlu0 %947
        %v949 = vsel %vm603, %v929, 0.0
        %950 = vadd.xlane.f32.xlu0 %v949
        %v951 = vpop.xlane.xlu0 %950
        %v952 = vsel %vm603, %v931, 0.0
        %953 = vadd.xlane.f32.xlu0 %v952
        %v954 = vpop.xlane.xlu0 %953
        %v955 = vsel %vm603, %v933, 0.0
        %956 = vadd.xlane.f32.xlu0 %v955
        %v957 = vpop.xlane.xlu0 %956
        %v958 = vrcp.pop %v936
        %v959 = vrcp.pop %v939
        %v960 = vrcp.pop %v942
        %v961 = vrcp.pop %v945
        %v962 = vrcp.pop %v948
        %v963 = vrcp.pop %v951
        %v964 = vrcp.pop %v954
        %v965 = vrcp.pop %v957
        %v966 = vmul.f32 %v919, %v958
        %v967 = vmul.f32 %v921, %v959
        %v968 = vmul.f32 %v923, %v960
        %v969 = vmul.f32 %v925, %v961
        %v970 = vmul.f32 %v927, %v962
        %v971 = vmul.f32 %v929, %v963
        %v972 = vmul.f32 %v931, %v964
        %v973 = vmul.f32 %v933, %v965
        %v974 = vpack.c.bf16 %v967, %v966
        %v975 = vpack.c.bf16 %v969, %v968
        %v976 = vpack.c.bf16 %v971, %v970
        %v977 = vpack.c.bf16 %v973, %v972
        %982 = vrot.lane.b32.xlu0 %v433, 112
        %v983 = vpop.permute.xlu0 %982
        %984 = vrot.lane.b32.xlu0 %v435, 112
        %v985 = vpop.permute.xlu0 %984
        %986 = vrot.lane.b32.xlu0 %v437, 112
        %v987 = vpop.permute.xlu0 %986
        %988 = vrot.lane.b32.xlu0 %v439, 112
        %v989 = vpop.permute.xlu0 %988
        %v995 = vsel %vm603, %v974, 0
        %v998 = vsel %vm603, %v975, 0
        %v1001 = vsel %vm603, %v976, 0
        %v1004 = vsel %vm603, %v977, 0
        %1006 = vmatprep.subr.bf16.mxu0 0
        %1007 = vmatpush1.bf16.msra.mxu0 0
        %1008 = vmatprep.subr.bf16.mxu0 0
        %1009 = vmatpush1.bf16.msra.mxu0 0
        %1010 = vmatprep.subr.bf16.mxu0 0
        %1011 = vmatpush1.bf16.msra.mxu0 0
        %1012 = vmatprep.subr.bf16.mxu0 0
        %1013 = vmatpush1.bf16.msra.mxu0 0
        %1014 = vmatprep.subr.bf16.mxu0 0
        %1015 = vmatpush1.bf16.msra.mxu0 %v989
        %1016 = vmatprep.subr.bf16.mxu0 0
        %1017 = vmatpush1.bf16.msra.mxu0 %v987
        %1018 = vmatprep.subr.bf16.mxu0 0
        %1019 = vmatpush1.bf16.msra.mxu0 %v985
        %1020 = vmatprep.subr.bf16.mxu0 0
        %1021 = vmatpush1.bf16.msra.mxu0 %v983
        %1022 = vmatprep.subr.bf16.mxu0 0
        %1023 = vmatpush2.bf16.msra.mxu0 0
        %1024 = vmatprep.subr.bf16.mxu0 0
        %1025 = vmatpush2.bf16.msra.mxu0 0
        %1026 = vmatprep.subr.bf16.mxu0 0
        %1027 = vmatpush2.bf16.msra.mxu0 0
        %1028 = vmatprep.subr.bf16.mxu0 0
        %1029 = vmatpush2.bf16.msra.mxu0 0
        %1030 = vmatprep.subr.bf16.mxu0 0
        %1031 = vmatpush2.bf16.msra.mxu0 0
        %1032 = vmatprep.subr.bf16.mxu0 0
        %1033 = vmatpush2.bf16.msra.mxu0 0
        %1034 = vmatprep.subr.bf16.mxu0 0
        %1035 = vmatpush2.bf16.msra.mxu0 0
        %1036 = vmatprep.subr.bf16.mxu0 0
        %1037 = vmatpush2.bf16.msra.mxu0 0
        %1038 = vmatprep.mubr.bf16.mxu0 0
        %1039 = vmatmul.mubr.bf16.gmra.mxu0 %v995
        %v1040 = vpop.f32.mrf.mxu0
        %v1041 = vadd.f32 0.0, %v1040
        %v1042 = vpop.f32.mrf.mxu0
        %v1043 = vpop.f32.mrf.mxu0
        %v1044 = vadd.f32 0.0, %v1043
        %v1045 = vpop.f32.mrf.mxu0
        %1046 = vmatprep.mubr.bf16.mxu0 0
        %1047 = vmatmul.mubr.bf16.gmra.mxu0 %v998
        %v1048 = vpop.f32.mrf.mxu0
        %v1049 = vadd.f32 0.0, %v1048
        %v1050 = vpop.f32.mrf.mxu0
        %v1051 = vpop.f32.mrf.mxu0
        %v1052 = vadd.f32 0.0, %v1051
        %v1053 = vpop.f32.mrf.mxu0
        %1054 = vmatprep.mubr.bf16.mxu0 0
        %1055 = vmatmul.mubr.bf16.gmra.mxu0 %v1001
        %v1056 = vpop.f32.mrf.mxu0
        %v1057 = vadd.f32 0.0, %v1056
        %v1058 = vpop.f32.mrf.mxu0
        %v1059 = vpop.f32.mrf.mxu0
        %v1060 = vadd.f32 0.0, %v1059
        %v1061 = vpop.f32.mrf.mxu0
        %1062 = vmatprep.mubr.bf16.mxu0 0
        %1063 = vmatmul.mubr.bf16.gmra.mxu0 %v1004
        %v1064 = vpop.f32.mrf.mxu0
        %v1065 = vadd.f32 0.0, %v1064
        %v1066 = vpop.f32.mrf.mxu0
        %v1067 = vpop.f32.mrf.mxu0
        %v1068 = vadd.f32 0.0, %v1067
        %v1069 = vpop.f32.mrf.mxu0
        %1070 = vdwg.mxu0
        %1071 = vrot.lane.b32.xlu0 %v432, 96
        %v1072 = vpop.permute.xlu0 %1071
        %1073 = vrot.lane.b32.xlu0 %v434, 96
        %v1074 = vpop.permute.xlu0 %1073
        %1075 = vrot.lane.b32.xlu0 %v436, 96
        %v1076 = vpop.permute.xlu0 %1075
        %1077 = vrot.lane.b32.xlu0 %v438, 96
        %v1078 = vpop.permute.xlu0 %1077
        %1079 = vrot.lane.b32.xlu0 %v432, 32
        %v1080 = vpop.permute.xlu0 %1079
        %1081 = vrot.lane.b32.xlu0 %v434, 32
        %v1082 = vpop.permute.xlu0 %1081
        %1083 = vrot.lane.b32.xlu0 %v436, 32
        %v1084 = vpop.permute.xlu0 %1083
        %1085 = vrot.lane.b32.xlu0 %v438, 32
        %v1086 = vpop.permute.xlu0 %1085
        %v1088 = vsel %vm505, %v1072, 0
        %v1091 = vsel %vm505, %v1074, 0
        %v1094 = vsel %vm505, %v1076, 0
        %v1097 = vsel %vm505, %v1078, 0
        %v1100 = vsel %vm505, %v1080, 0
        %v1103 = vsel %vm505, %v1082, 0
        %v1106 = vsel %vm505, %v1084, 0
        %v1109 = vsel %vm505, %v1086, 0
        %1111 = vmatprep.subr.bf16.mxu0 0
        %1112 = vmatpush1.bf16.xpose.msra.mxu0 0
        %1113 = vmatprep.subr.bf16.mxu0 0
        %1114 = vmatpush1.bf16.xpose.msra.mxu0 0
        %1115 = vmatprep.subr.bf16.mxu0 0
        %1116 = vmatpush1.bf16.xpose.msra.mxu0 0
        %1117 = vmatprep.subr.bf16.mxu0 0
        %1118 = vmatpush1.bf16.xpose.msra.mxu0 0
        %1119 = vmatprep.subr.bf16.mxu0 0
        %1120 = vmatpush1.bf16.xpose.msra.mxu0 %v1109
        %1121 = vmatprep.subr.bf16.mxu0 0
        %1122 = vmatpush1.bf16.xpose.msra.mxu0 %v1106
        %1123 = vmatprep.subr.bf16.mxu0 0
        %1124 = vmatpush1.bf16.xpose.msra.mxu0 %v1103
        %1125 = vmatprep.subr.bf16.mxu0 0
        %1126 = vmatpush1.bf16.xpose.msra.mxu0 %v1100
        %1127 = vmatprep.subr.bf16.mxu0 0
        %1128 = vmatpush2.bf16.xpose.msra.mxu0 0
        %1129 = vmatprep.subr.bf16.mxu0 0
        %1130 = vmatpush2.bf16.xpose.msra.mxu0 0
        %1131 = vmatprep.subr.bf16.mxu0 0
        %1132 = vmatpush2.bf16.xpose.msra.mxu0 0
        %1133 = vmatprep.subr.bf16.mxu0 0
        %1134 = vmatpush2.bf16.xpose.msra.mxu0 0
        %1135 = vmatprep.subr.bf16.mxu0 0
        %1136 = vmatpush2.bf16.xpose.msra.mxu0 0
        %1137 = vmatprep.subr.bf16.mxu0 0
        %1138 = vmatpush2.bf16.xpose.msra.mxu0 0
        %1139 = vmatprep.subr.bf16.mxu0 0
        %1140 = vmatpush2.bf16.xpose.msra.mxu0 0
        %1141 = vmatprep.subr.bf16.mxu0 0
        %1142 = vmatpush2.bf16.xpose.msra.mxu0 0
        %1143 = vmatprep.mubr.bf16.mxu0 0
        %1144 = vmatmul.mubr.bf16.gmra.mxu0 %v1088
        %v1145 = vpop.f32.mrf.mxu0
        %v1146 = vadd.f32 0.0, %v1145
        %v1147 = vpop.f32.mrf.mxu0
        %v1148 = vpop.f32.mrf.mxu0
        %v1149 = vadd.f32 0.0, %v1148
        %v1150 = vpop.f32.mrf.mxu0
        %1151 = vmatprep.mubr.bf16.mxu0 0
        %1152 = vmatmul.mubr.bf16.gmra.mxu0 %v1091
        %v1153 = vpop.f32.mrf.mxu0
        %v1154 = vadd.f32 0.0, %v1153
        %v1155 = vpop.f32.mrf.mxu0
        %v1156 = vpop.f32.mrf.mxu0
        %v1157 = vadd.f32 0.0, %v1156
        %v1158 = vpop.f32.mrf.mxu0
        %1159 = vmatprep.mubr.bf16.mxu0 0
        %1160 = vmatmul.mubr.bf16.gmra.mxu0 %v1094
        %v1161 = vpop.f32.mrf.mxu0
        %v1162 = vadd.f32 0.0, %v1161
        %v1163 = vpop.f32.mrf.mxu0
        %v1164 = vpop.f32.mrf.mxu0
        %v1165 = vadd.f32 0.0, %v1164
        %v1166 = vpop.f32.mrf.mxu0
        %1167 = vmatprep.mubr.bf16.mxu0 0
        %1168 = vmatmul.mubr.bf16.gmra.mxu0 %v1097
        %v1169 = vpop.f32.mrf.mxu0
        %v1170 = vadd.f32 0.0, %v1169
        %v1171 = vpop.f32.mrf.mxu0
        %v1172 = vpop.f32.mrf.mxu0
        %v1173 = vadd.f32 0.0, %v1172
        %v1174 = vpop.f32.mrf.mxu0
        %1175 = vdwg.mxu0
        %v1176 = vsel %vm485, %v1146, -1e+09
        %v1177 = vsel %vm486, %v1149, -1e+09
        %v1178 = vsel %vm487, %v1154, -1e+09
        %v1179 = vsel %vm488, %v1157, -1e+09
        %v1180 = vsel %vm489, %v1162, -1e+09
        %v1181 = vsel %vm490, %v1165, -1e+09
        %v1182 = vsel %vm491, %v1170, -1e+09
        %v1183 = vsel %vm492, %v1173, -1e+09
        %v1184 = vsel %vm603, %v1176, -inf
        %1185 = vmax.xlane.f32.xlu0 %v1184
        %v1186 = vpop.xlane.xlu0 %1185
        %v1187 = vsel %vm603, %v1177, -inf
        %1188 = vmax.xlane.f32.xlu0 %v1187
        %v1189 = vpop.xlane.xlu0 %1188
        %v1190 = vsel %vm603, %v1178, -inf
        %1191 = vmax.xlane.f32.xlu0 %v1190
        %v1192 = vpop.xlane.xlu0 %1191
        %v1193 = vsel %vm603, %v1179, -inf
        %1194 = vmax.xlane.f32.xlu0 %v1193
        %v1195 = vpop.xlane.xlu0 %1194
        %v1196 = vsel %vm603, %v1180, -inf
        %1197 = vmax.xlane.f32.xlu0 %v1196
        %v1198 = vpop.xlane.xlu0 %1197
        %v1199 = vsel %vm603, %v1181, -inf
        %1200 = vmax.xlane.f32.xlu0 %v1199
        %v1201 = vpop.xlane.xlu0 %1200
        %v1202 = vsel %vm603, %v1182, -inf
        %1203 = vmax.xlane.f32.xlu0 %v1202
        %v1204 = vpop.xlane.xlu0 %1203
        %v1205 = vsel %vm603, %v1183, -inf
        %1206 = vmax.xlane.f32.xlu0 %v1205
        %v1207 = vpop.xlane.xlu0 %1206
        %v1208 = vsub.f32 %v1176, %v1186
        %v1209 = vsub.f32 %v1177, %v1189
        %v1210 = vsub.f32 %v1178, %v1192
        %v1211 = vsub.f32 %v1179, %v1195
        %v1212 = vsub.f32 %v1180, %v1198
        %v1213 = vsub.f32 %v1181, %v1201
        %v1214 = vsub.f32 %v1182, %v1204
        %v1215 = vsub.f32 %v1183, %v1207
        %v1216 = vmul.f32 %v1208, 1.442695
        %v1217 = vpow.pop %v1216
        %v1218 = vmul.f32 %v1209, 1.442695
        %v1219 = vpow.pop %v1218
        %v1220 = vmul.f32 %v1210, 1.442695
        %v1221 = vpow.pop %v1220
        %v1222 = vmul.f32 %v1211, 1.442695
        %v1223 = vpow.pop %v1222
        %v1224 = vmul.f32 %v1212, 1.442695
        %v1225 = vpow.pop %v1224
        %v1226 = vmul.f32 %v1213, 1.442695
        %v1227 = vpow.pop %v1226
        %v1228 = vmul.f32 %v1214, 1.442695
        %v1229 = vpow.pop %v1228
        %v1230 = vmul.f32 %v1215, 1.442695
        %v1231 = vpow.pop %v1230
        %v1232 = vsel %vm603, %v1217, 0.0
        %1233 = vadd.xlane.f32.xlu0 %v1232
        %v1234 = vpop.xlane.xlu0 %1233
        %v1235 = vsel %vm603, %v1219, 0.0
        %1236 = vadd.xlane.f32.xlu0 %v1235
        %v1237 = vpop.xlane.xlu0 %1236
        %v1238 = vsel %vm603, %v1221, 0.0
        %1239 = vadd.xlane.f32.xlu0 %v1238
        %v1240 = vpop.xlane.xlu0 %1239
        %v1241 = vsel %vm603, %v1223, 0.0
        %1242 = vadd.xlane.f32.xlu0 %v1241
        %v1243 = vpop.xlane.xlu0 %1242
        %v1244 = vsel %vm603, %v1225, 0.0
        %1245 = vadd.xlane.f32.xlu0 %v1244
        %v1246 = vpop.xlane.xlu0 %1245
        %v1247 = vsel %vm603, %v1227, 0.0
        %1248 = vadd.xlane.f32.xlu0 %v1247
        %v1249 = vpop.xlane.xlu0 %1248
        %v1250 = vsel %vm603, %v1229, 0.0
        %1251 = vadd.xlane.f32.xlu0 %v1250
        %v1252 = vpop.xlane.xlu0 %1251
        %v1253 = vsel %vm603, %v1231, 0.0
        %1254 = vadd.xlane.f32.xlu0 %v1253
        %v1255 = vpop.xlane.xlu0 %1254
        %v1256 = vrcp.pop %v1234
        %v1257 = vrcp.pop %v1237
        %v1258 = vrcp.pop %v1240
        %v1259 = vrcp.pop %v1243
        %v1260 = vrcp.pop %v1246
        %v1261 = vrcp.pop %v1249
        %v1262 = vrcp.pop %v1252
        %v1263 = vrcp.pop %v1255
        %v1264 = vmul.f32 %v1217, %v1256
        %v1265 = vmul.f32 %v1219, %v1257
        %v1266 = vmul.f32 %v1221, %v1258
        %v1267 = vmul.f32 %v1223, %v1259
        %v1268 = vmul.f32 %v1225, %v1260
        %v1269 = vmul.f32 %v1227, %v1261
        %v1270 = vmul.f32 %v1229, %v1262
        %v1271 = vmul.f32 %v1231, %v1263
        %v1272 = vpack.c.bf16 %v1265, %v1264
        %v1273 = vpack.c.bf16 %v1267, %v1266
        %v1274 = vpack.c.bf16 %v1269, %v1268
        %v1275 = vpack.c.bf16 %v1271, %v1270
        %1276 = vrot.lane.b32.xlu0 %v433, 96
        %v1277 = vpop.permute.xlu0 %1276
        %1278 = vrot.lane.b32.xlu0 %v435, 96
        %v1279 = vpop.permute.xlu0 %1278
        %1280 = vrot.lane.b32.xlu0 %v437, 96
        %v1281 = vpop.permute.xlu0 %1280
        %1282 = vrot.lane.b32.xlu0 %v439, 96
        %v1283 = vpop.permute.xlu0 %1282
        %v1289 = vsel %vm603, %v1272, 0
        %v1292 = vsel %vm603, %v1273, 0
        %v1295 = vsel %vm603, %v1274, 0
        %v1298 = vsel %vm603, %v1275, 0
        %1300 = vmatprep.subr.bf16.mxu0 0
        %1301 = vmatpush1.bf16.msra.mxu0 0
        %1302 = vmatprep.subr.bf16.mxu0 0
        %1303 = vmatpush1.bf16.msra.mxu0 0
        %1304 = vmatprep.subr.bf16.mxu0 0
        %1305 = vmatpush1.bf16.msra.mxu0 0
        %1306 = vmatprep.subr.bf16.mxu0 0
        %1307 = vmatpush1.bf16.msra.mxu0 0
        %1308 = vmatprep.subr.bf16.mxu0 0
        %1309 = vmatpush1.bf16.msra.mxu0 %v1283
        %1310 = vmatprep.subr.bf16.mxu0 0
        %1311 = vmatpush1.bf16.msra.mxu0 %v1281
        %1312 = vmatprep.subr.bf16.mxu0 0
        %1313 = vmatpush1.bf16.msra.mxu0 %v1279
        %1314 = vmatprep.subr.bf16.mxu0 0
        %1315 = vmatpush1.bf16.msra.mxu0 %v1277
        %1316 = vmatprep.subr.bf16.mxu0 0
        %1317 = vmatpush2.bf16.msra.mxu0 0
        %1318 = vmatprep.subr.bf16.mxu0 0
        %1319 = vmatpush2.bf16.msra.mxu0 0
        %1320 = vmatprep.subr.bf16.mxu0 0
        %1321 = vmatpush2.bf16.msra.mxu0 0
        %1322 = vmatprep.subr.bf16.mxu0 0
        %1323 = vmatpush2.bf16.msra.mxu0 0
        %1324 = vmatprep.subr.bf16.mxu0 0
        %1325 = vmatpush2.bf16.msra.mxu0 0
        %1326 = vmatprep.subr.bf16.mxu0 0
        %1327 = vmatpush2.bf16.msra.mxu0 0
        %1328 = vmatprep.subr.bf16.mxu0 0
        %1329 = vmatpush2.bf16.msra.mxu0 0
        %1330 = vmatprep.subr.bf16.mxu0 0
        %1331 = vmatpush2.bf16.msra.mxu0 0
        %1332 = vmatprep.mubr.bf16.mxu0 0
        %1333 = vmatmul.mubr.bf16.gmra.mxu0 %v1289
        %v1334 = vpop.f32.mrf.mxu0
        %v1335 = vadd.f32 0.0, %v1334
        %v1336 = vpop.f32.mrf.mxu0
        %v1337 = vpop.f32.mrf.mxu0
        %v1338 = vadd.f32 0.0, %v1337
        %v1339 = vpop.f32.mrf.mxu0
        %1340 = vmatprep.mubr.bf16.mxu0 0
        %1341 = vmatmul.mubr.bf16.gmra.mxu0 %v1292
        %v1342 = vpop.f32.mrf.mxu0
        %v1343 = vadd.f32 0.0, %v1342
        %v1344 = vpop.f32.mrf.mxu0
        %v1345 = vpop.f32.mrf.mxu0
        %v1346 = vadd.f32 0.0, %v1345
        %v1347 = vpop.f32.mrf.mxu0
        %1348 = vmatprep.mubr.bf16.mxu0 0
        %1349 = vmatmul.mubr.bf16.gmra.mxu0 %v1295
        %v1350 = vpop.f32.mrf.mxu0
        %v1351 = vadd.f32 0.0, %v1350
        %v1352 = vpop.f32.mrf.mxu0
        %v1353 = vpop.f32.mrf.mxu0
        %v1354 = vadd.f32 0.0, %v1353
        %v1355 = vpop.f32.mrf.mxu0
        %1356 = vmatprep.mubr.bf16.mxu0 0
        %1357 = vmatmul.mubr.bf16.gmra.mxu0 %v1298
        %v1358 = vpop.f32.mrf.mxu0
        %v1359 = vadd.f32 0.0, %v1358
        %v1360 = vpop.f32.mrf.mxu0
        %v1361 = vpop.f32.mrf.mxu0
        %v1362 = vadd.f32 0.0, %v1361
        %v1363 = vpop.f32.mrf.mxu0
        %1364 = vdwg.mxu0
        %1365 = vrot.lane.b32.xlu0 %v432, 80
        %v1366 = vpop.permute.xlu0 %1365
        %1367 = vrot.lane.b32.xlu0 %v434, 80
        %v1368 = vpop.permute.xlu0 %1367
        %1369 = vrot.lane.b32.xlu0 %v436, 80
        %v1370 = vpop.permute.xlu0 %1369
        %1371 = vrot.lane.b32.xlu0 %v438, 80
        %v1372 = vpop.permute.xlu0 %1371
        %1373 = vrot.lane.b32.xlu0 %v432, 16
        %v1374 = vpop.permute.xlu0 %1373
        %1375 = vrot.lane.b32.xlu0 %v434, 16
        %v1376 = vpop.permute.xlu0 %1375
        %1377 = vrot.lane.b32.xlu0 %v436, 16
        %v1378 = vpop.permute.xlu0 %1377
        %1379 = vrot.lane.b32.xlu0 %v438, 16
        %v1380 = vpop.permute.xlu0 %1379
        %v1382 = vsel %vm505, %v1366, 0
        %v1385 = vsel %vm505, %v1368, 0
        %v1388 = vsel %vm505, %v1370, 0
        %v1391 = vsel %vm505, %v1372, 0
        %v1394 = vsel %vm505, %v1374, 0
        %v1397 = vsel %vm505, %v1376, 0
        %v1400 = vsel %vm505, %v1378, 0
        %v1403 = vsel %vm505, %v1380, 0
        %1405 = vmatprep.subr.bf16.mxu0 0
        %1406 = vmatpush1.bf16.xpose.msra.mxu0 0
        %1407 = vmatprep.subr.bf16.mxu0 0
        %1408 = vmatpush1.bf16.xpose.msra.mxu0 0
        %1409 = vmatprep.subr.bf16.mxu0 0
        %1410 = vmatpush1.bf16.xpose.msra.mxu0 0
        %1411 = vmatprep.subr.bf16.mxu0 0
        %1412 = vmatpush1.bf16.xpose.msra.mxu0 0
        %1413 = vmatprep.subr.bf16.mxu0 0
        %1414 = vmatpush1.bf16.xpose.msra.mxu0 %v1403
        %1415 = vmatprep.subr.bf16.mxu0 0
        %1416 = vmatpush1.bf16.xpose.msra.mxu0 %v1400
        %1417 = vmatprep.subr.bf16.mxu0 0
        %1418 = vmatpush1.bf16.xpose.msra.mxu0 %v1397
        %1419 = vmatprep.subr.bf16.mxu0 0
        %1420 = vmatpush1.bf16.xpose.msra.mxu0 %v1394
        %1421 = vmatprep.subr.bf16.mxu0 0
        %1422 = vmatpush2.bf16.xpose.msra.mxu0 0
        %1423 = vmatprep.subr.bf16.mxu0 0
        %1424 = vmatpush2.bf16.xpose.msra.mxu0 0
        %1425 = vmatprep.subr.bf16.mxu0 0
        %1426 = vmatpush2.bf16.xpose.msra.mxu0 0
        %1427 = vmatprep.subr.bf16.mxu0 0
        %1428 = vmatpush2.bf16.xpose.msra.mxu0 0
        %1429 = vmatprep.subr.bf16.mxu0 0
        %1430 = vmatpush2.bf16.xpose.msra.mxu0 0
        %1431 = vmatprep.subr.bf16.mxu0 0
        %1432 = vmatpush2.bf16.xpose.msra.mxu0 0
        %1433 = vmatprep.subr.bf16.mxu0 0
        %1434 = vmatpush2.bf16.xpose.msra.mxu0 0
        %1435 = vmatprep.subr.bf16.mxu0 0
        %1436 = vmatpush2.bf16.xpose.msra.mxu0 0
        %1437 = vmatprep.mubr.bf16.mxu0 0
        %1438 = vmatmul.mubr.bf16.gmra.mxu0 %v1382
        %v1439 = vpop.f32.mrf.mxu0
        %v1440 = vadd.f32 0.0, %v1439
        %v1441 = vpop.f32.mrf.mxu0
        %v1442 = vpop.f32.mrf.mxu0
        %v1443 = vadd.f32 0.0, %v1442
        %v1444 = vpop.f32.mrf.mxu0
        %1445 = vmatprep.mubr.bf16.mxu0 0
        %1446 = vmatmul.mubr.bf16.gmra.mxu0 %v1385
        %v1447 = vpop.f32.mrf.mxu0
        %v1448 = vadd.f32 0.0, %v1447
        %v1449 = vpop.f32.mrf.mxu0
        %v1450 = vpop.f32.mrf.mxu0
        %v1451 = vadd.f32 0.0, %v1450
        %v1452 = vpop.f32.mrf.mxu0
        %1453 = vmatprep.mubr.bf16.mxu0 0
        %1454 = vmatmul.mubr.bf16.gmra.mxu0 %v1388
        %v1455 = vpop.f32.mrf.mxu0
        %v1456 = vadd.f32 0.0, %v1455
        %v1457 = vpop.f32.mrf.mxu0
        %v1458 = vpop.f32.mrf.mxu0
        %v1459 = vadd.f32 0.0, %v1458
        %v1460 = vpop.f32.mrf.mxu0
        %1461 = vmatprep.mubr.bf16.mxu0 0
        %1462 = vmatmul.mubr.bf16.gmra.mxu0 %v1391
        %v1463 = vpop.f32.mrf.mxu0
        %v1464 = vadd.f32 0.0, %v1463
        %v1465 = vpop.f32.mrf.mxu0
        %v1466 = vpop.f32.mrf.mxu0
        %v1467 = vadd.f32 0.0, %v1466
        %v1468 = vpop.f32.mrf.mxu0
        %1469 = vdwg.mxu0
        %v1470 = vsel %vm485, %v1440, -1e+09
        %v1471 = vsel %vm486, %v1443, -1e+09
        %v1472 = vsel %vm487, %v1448, -1e+09
        %v1473 = vsel %vm488, %v1451, -1e+09
        %v1474 = vsel %vm489, %v1456, -1e+09
        %v1475 = vsel %vm490, %v1459, -1e+09
        %v1476 = vsel %vm491, %v1464, -1e+09
        %v1477 = vsel %vm492, %v1467, -1e+09
        %v1478 = vsel %vm603, %v1470, -inf
        %1479 = vmax.xlane.f32.xlu0 %v1478
        %v1480 = vpop.xlane.xlu0 %1479
        %v1481 = vsel %vm603, %v1471, -inf
        %1482 = vmax.xlane.f32.xlu0 %v1481
        %v1483 = vpop.xlane.xlu0 %1482
        %v1484 = vsel %vm603, %v1472, -inf
        %1485 = vmax.xlane.f32.xlu0 %v1484
        %v1486 = vpop.xlane.xlu0 %1485
        %v1487 = vsel %vm603, %v1473, -inf
        %1488 = vmax.xlane.f32.xlu0 %v1487
        %v1489 = vpop.xlane.xlu0 %1488
        %v1490 = vsel %vm603, %v1474, -inf
        %1491 = vmax.xlane.f32.xlu0 %v1490
        %v1492 = vpop.xlane.xlu0 %1491
        %v1493 = vsel %vm603, %v1475, -inf
        %1494 = vmax.xlane.f32.xlu0 %v1493
        %v1495 = vpop.xlane.xlu0 %1494
        %v1496 = vsel %vm603, %v1476, -inf
        %1497 = vmax.xlane.f32.xlu0 %v1496
        %v1498 = vpop.xlane.xlu0 %1497
        %v1499 = vsel %vm603, %v1477, -inf
        %1500 = vmax.xlane.f32.xlu0 %v1499
        %v1501 = vpop.xlane.xlu0 %1500
        %v1502 = vsub.f32 %v1470, %v1480
        %v1503 = vsub.f32 %v1471, %v1483
        %v1504 = vsub.f32 %v1472, %v1486
        %v1505 = vsub.f32 %v1473, %v1489
        %v1506 = vsub.f32 %v1474, %v1492
        %v1507 = vsub.f32 %v1475, %v1495
        %v1508 = vsub.f32 %v1476, %v1498
        %v1509 = vsub.f32 %v1477, %v1501
        %v1510 = vmul.f32 %v1502, 1.442695
        %v1511 = vpow.pop %v1510
        %v1512 = vmul.f32 %v1503, 1.442695
        %v1513 = vpow.pop %v1512
        %v1514 = vmul.f32 %v1504, 1.442695
        %v1515 = vpow.pop %v1514
        %v1516 = vmul.f32 %v1505, 1.442695
        %v1517 = vpow.pop %v1516
        %v1518 = vmul.f32 %v1506, 1.442695
        %v1519 = vpow.pop %v1518
        %v1520 = vmul.f32 %v1507, 1.442695
        %v1521 = vpow.pop %v1520
        %v1522 = vmul.f32 %v1508, 1.442695
        %v1523 = vpow.pop %v1522
        %v1524 = vmul.f32 %v1509, 1.442695
        %v1525 = vpow.pop %v1524
        %v1526 = vsel %vm603, %v1511, 0.0
        %1527 = vadd.xlane.f32.xlu0 %v1526
        %v1528 = vpop.xlane.xlu0 %1527
        %v1529 = vsel %vm603, %v1513, 0.0
        %1530 = vadd.xlane.f32.xlu0 %v1529
        %v1531 = vpop.xlane.xlu0 %1530
        %v1532 = vsel %vm603, %v1515, 0.0
        %1533 = vadd.xlane.f32.xlu0 %v1532
        %v1534 = vpop.xlane.xlu0 %1533
        %v1535 = vsel %vm603, %v1517, 0.0
        %1536 = vadd.xlane.f32.xlu0 %v1535
        %v1537 = vpop.xlane.xlu0 %1536
        %v1538 = vsel %vm603, %v1519, 0.0
        %1539 = vadd.xlane.f32.xlu0 %v1538
        %v1540 = vpop.xlane.xlu0 %1539
        %v1541 = vsel %vm603, %v1521, 0.0
        %1542 = vadd.xlane.f32.xlu0 %v1541
        %v1543 = vpop.xlane.xlu0 %1542
        %v1544 = vsel %vm603, %v1523, 0.0
        %1545 = vadd.xlane.f32.xlu0 %v1544
        %v1546 = vpop.xlane.xlu0 %1545
        %v1547 = vsel %vm603, %v1525, 0.0
        %1548 = vadd.xlane.f32.xlu0 %v1547
        %v1549 = vpop.xlane.xlu0 %1548
        %v1550 = vrcp.pop %v1528
        %v1551 = vrcp.pop %v1531
        %v1552 = vrcp.pop %v1534
        %v1553 = vrcp.pop %v1537
        %v1554 = vrcp.pop %v1540
        %v1555 = vrcp.pop %v1543
        %v1556 = vrcp.pop %v1546
        %v1557 = vrcp.pop %v1549
        %v1558 = vmul.f32 %v1511, %v1550
        %v1559 = vmul.f32 %v1513, %v1551
        %v1560 = vmul.f32 %v1515, %v1552
        %v1561 = vmul.f32 %v1517, %v1553
        %v1562 = vmul.f32 %v1519, %v1554
        %v1563 = vmul.f32 %v1521, %v1555
        %v1564 = vmul.f32 %v1523, %v1556
        %v1565 = vmul.f32 %v1525, %v1557
        %v1566 = vpack.c.bf16 %v1559, %v1558
        %v1567 = vpack.c.bf16 %v1561, %v1560
        %v1568 = vpack.c.bf16 %v1563, %v1562
        %v1569 = vpack.c.bf16 %v1565, %v1564
        %1570 = vrot.lane.b32.xlu0 %v433, 80
        %v1571 = vpop.permute.xlu0 %1570
        %1572 = vrot.lane.b32.xlu0 %v435, 80
        %v1573 = vpop.permute.xlu0 %1572
        %1574 = vrot.lane.b32.xlu0 %v437, 80
        %v1575 = vpop.permute.xlu0 %1574
        %1576 = vrot.lane.b32.xlu0 %v439, 80
        %v1577 = vpop.permute.xlu0 %1576
        %v1583 = vsel %vm603, %v1566, 0
        %v1586 = vsel %vm603, %v1567, 0
        %v1589 = vsel %vm603, %v1568, 0
        %v1592 = vsel %vm603, %v1569, 0
        %1594 = vmatprep.subr.bf16.mxu0 0
        %1595 = vmatpush1.bf16.msra.mxu0 0
        %1596 = vmatprep.subr.bf16.mxu0 0
        %1597 = vmatpush1.bf16.msra.mxu0 0
        %1598 = vmatprep.subr.bf16.mxu0 0
        %1599 = vmatpush1.bf16.msra.mxu0 0
        %1600 = vmatprep.subr.bf16.mxu0 0
        %1601 = vmatpush1.bf16.msra.mxu0 0
        %1602 = vmatprep.subr.bf16.mxu0 0
        %1603 = vmatpush1.bf16.msra.mxu0 %v1577
        %1604 = vmatprep.subr.bf16.mxu0 0
        %1605 = vmatpush1.bf16.msra.mxu0 %v1575
        %1606 = vmatprep.subr.bf16.mxu0 0
        %1607 = vmatpush1.bf16.msra.mxu0 %v1573
        %1608 = vmatprep.subr.bf16.mxu0 0
        %1609 = vmatpush1.bf16.msra.mxu0 %v1571
        %1610 = vmatprep.subr.bf16.mxu0 0
        %1611 = vmatpush2.bf16.msra.mxu0 0
        %1612 = vmatprep.subr.bf16.mxu0 0
        %1613 = vmatpush2.bf16.msra.mxu0 0
        %1614 = vmatprep.subr.bf16.mxu0 0
        %1615 = vmatpush2.bf16.msra.mxu0 0
        %1616 = vmatprep.subr.bf16.mxu0 0
        %1617 = vmatpush2.bf16.msra.mxu0 0
        %1618 = vmatprep.subr.bf16.mxu0 0
        %1619 = vmatpush2.bf16.msra.mxu0 0
        %1620 = vmatprep.subr.bf16.mxu0 0
        %1621 = vmatpush2.bf16.msra.mxu0 0
        %1622 = vmatprep.subr.bf16.mxu0 0
        %1623 = vmatpush2.bf16.msra.mxu0 0
        %1624 = vmatprep.subr.bf16.mxu0 0
        %1625 = vmatpush2.bf16.msra.mxu0 0
        %1626 = vmatprep.mubr.bf16.mxu0 0
        %1627 = vmatmul.mubr.bf16.gmra.mxu0 %v1583
        %v1628 = vpop.f32.mrf.mxu0
        %v1629 = vadd.f32 0.0, %v1628
        %v1630 = vpop.f32.mrf.mxu0
        %v1631 = vpop.f32.mrf.mxu0
        %v1632 = vadd.f32 0.0, %v1631
        %v1633 = vpop.f32.mrf.mxu0
        %1634 = vmatprep.mubr.bf16.mxu0 0
        %1635 = vmatmul.mubr.bf16.gmra.mxu0 %v1586
        %v1636 = vpop.f32.mrf.mxu0
        %v1637 = vadd.f32 0.0, %v1636
        %v1638 = vpop.f32.mrf.mxu0
        %v1639 = vpop.f32.mrf.mxu0
        %v1640 = vadd.f32 0.0, %v1639
        %v1641 = vpop.f32.mrf.mxu0
        %1642 = vmatprep.mubr.bf16.mxu0 0
        %1643 = vmatmul.mubr.bf16.gmra.mxu0 %v1589
        %v1644 = vpop.f32.mrf.mxu0
        %v1645 = vadd.f32 0.0, %v1644
        %v1646 = vpop.f32.mrf.mxu0
        %v1647 = vpop.f32.mrf.mxu0
        %v1648 = vadd.f32 0.0, %v1647
        %v1649 = vpop.f32.mrf.mxu0
        %1650 = vmatprep.mubr.bf16.mxu0 0
        %1651 = vmatmul.mubr.bf16.gmra.mxu0 %v1592
        %v1652 = vpop.f32.mrf.mxu0
        %v1653 = vadd.f32 0.0, %v1652
        %v1654 = vpop.f32.mrf.mxu0
        %v1655 = vpop.f32.mrf.mxu0
        %v1656 = vadd.f32 0.0, %v1655
        %v1657 = vpop.f32.mrf.mxu0
        %1658 = vdwg.mxu0
        %1667 = vrot.lane.b32.xlu0 %v1041, 16
        %v1668 = vpop.permute.xlu0 %1667
        %1669 = vrot.lane.b32.xlu0 %v1044, 16
        %v1670 = vpop.permute.xlu0 %1669
        %1671 = vrot.lane.b32.xlu0 %v1049, 16
        %v1672 = vpop.permute.xlu0 %1671
        %1673 = vrot.lane.b32.xlu0 %v1052, 16
        %v1674 = vpop.permute.xlu0 %1673
        %1675 = vrot.lane.b32.xlu0 %v1057, 16
        %v1676 = vpop.permute.xlu0 %1675
        %1677 = vrot.lane.b32.xlu0 %v1060, 16
        %v1678 = vpop.permute.xlu0 %1677
        %1679 = vrot.lane.b32.xlu0 %v1065, 16
        %v1680 = vpop.permute.xlu0 %1679
        %1681 = vrot.lane.b32.xlu0 %v1068, 16
        %v1682 = vpop.permute.xlu0 %1681
        %1699 = vrot.lane.b32.xlu0 %v1335, 32
        %v1700 = vpop.permute.xlu0 %1699
        %1701 = vrot.lane.b32.xlu0 %v1338, 32
        %v1702 = vpop.permute.xlu0 %1701
        %1703 = vrot.lane.b32.xlu0 %v1343, 32
        %v1704 = vpop.permute.xlu0 %1703
        %1705 = vrot.lane.b32.xlu0 %v1346, 32
        %v1706 = vpop.permute.xlu0 %1705
        %1707 = vrot.lane.b32.xlu0 %v1351, 32
        %v1708 = vpop.permute.xlu0 %1707
        %1709 = vrot.lane.b32.xlu0 %v1354, 32
        %v1710 = vpop.permute.xlu0 %1709
        %1711 = vrot.lane.b32.xlu0 %v1359, 32
        %v1712 = vpop.permute.xlu0 %1711
        %1713 = vrot.lane.b32.xlu0 %v1362, 32
        %v1714 = vpop.permute.xlu0 %1713
        %1731 = vrot.lane.b32.xlu0 %v1629, 48
        %v1732 = vpop.permute.xlu0 %1731
        %1733 = vrot.lane.b32.xlu0 %v1632, 48
        %v1734 = vpop.permute.xlu0 %1733
        %1735 = vrot.lane.b32.xlu0 %v1637, 48
        %v1736 = vpop.permute.xlu0 %1735
        %1737 = vrot.lane.b32.xlu0 %v1640, 48
        %v1738 = vpop.permute.xlu0 %1737
        %1739 = vrot.lane.b32.xlu0 %v1645, 48
        %v1740 = vpop.permute.xlu0 %1739
        %1741 = vrot.lane.b32.xlu0 %v1648, 48
        %v1742 = vpop.permute.xlu0 %1741
        %1743 = vrot.lane.b32.xlu0 %v1653, 48
        %v1744 = vpop.permute.xlu0 %1743
        %1745 = vrot.lane.b32.xlu0 %v1656, 48
        %v1746 = vpop.permute.xlu0 %1745
        %v1755 = vsel %vm505, %v743, %v1668
        %v1756 = vsel %vm505, %v746, %v1670
        %v1757 = vsel %vm505, %v751, %v1672
        %v1758 = vsel %vm505, %v754, %v1674
        %v1759 = vsel %vm505, %v759, %v1676
        %v1760 = vsel %vm505, %v762, %v1678
        %v1761 = vsel %vm505, %v767, %v1680
        %v1762 = vsel %vm505, %v770, %v1682
        %vm1763 = vcmask 261120
        %v1764 = vsel %vm1763, %v1755, %v1700
        %v1765 = vsel %vm1763, %v1756, %v1702
        %v1766 = vsel %vm1763, %v1757, %v1704
        %v1767 = vsel %vm1763, %v1758, %v1706
        %v1768 = vsel %vm1763, %v1759, %v1708
        %v1769 = vsel %vm1763, %v1760, %v1710
        %v1770 = vsel %vm1763, %v1761, %v1712
        %v1771 = vsel %vm1763, %v1762, %v1714
        %vm1772 = vcmask 392192
        %v1773 = vsel %vm1772, %v1764, %v1732
        %v1774 = vsel %vm1772, %v1765, %v1734
        %v1775 = vsel %vm1772, %v1766, %v1736
        %v1776 = vsel %vm1772, %v1767, %v1738
        %v1777 = vsel %vm1772, %v1768, %v1740
        %v1778 = vsel %vm1772, %v1769, %v1742
        %v1779 = vsel %vm1772, %v1770, %v1744
        %v1780 = vsel %vm1772, %v1771, %v1746
        %v1781 = vpack.c.bf16 %v1774, %v1773
        %v1782 = vpack.c.bf16 %v1776, %v1775
        %v1783 = vpack.c.bf16 %v1778, %v1777
        %v1784 = vpack.c.bf16 %v1780, %v1779
        %v1785 = vld [vmem:[%s249] sm:$0xf]
        %v1786 = vld [vmem:[%s249 + $0x4] sm:$0xf]
        %v1787 = vld [vmem:[%s249 + $0x8] sm:$0xf]
        %v1788 = vld [vmem:[%s249 + $0xc] sm:$0xf]
        %v1789 = vld [vmem:[%s249 + $0x10] sm:$0xf]
        %v1790 = vld [vmem:[%s249 + $0x14] sm:$0xf]
        %v1791 = vld [vmem:[%s249 + $0x18] sm:$0xf]
        %v1792 = vld [vmem:[%s249 + $0x1c] sm:$0xf]
        %v1801 = vunpack.c.l.b16 %v1785
        %v1802 = vunpack.c.l.b16 %v1786
        %v1803 = vunpack.c.l.b16 %v1787
        %v1804 = vunpack.c.l.b16 %v1788
        %v1805 = vunpack.c.l.b16 %v1789
        %v1806 = vunpack.c.l.b16 %v1790
        %v1807 = vunpack.c.l.b16 %v1791
        %v1808 = vunpack.c.l.b16 %v1792
        %v1809 = vpack.c.b16 %v1802, %v1801
        %v1810 = vpack.c.b16 %v1804, %v1803
        %v1811 = vpack.c.b16 %v1806, %v1805
        %v1812 = vpack.c.b16 %v1808, %v1807
        %v1818 = vsel %vm603, %v1781, 0
        %v1821 = vsel %vm603, %v1782, 0
        %v1824 = vsel %vm603, %v1783, 0
        %v1827 = vsel %vm603, %v1784, 0
        %1829 = vmatprep.subr.bf16.mxu0 0
        %1830 = vmatpush1.bf16.msra.mxu0 0
        %1831 = vmatprep.subr.bf16.mxu0 0
        %1832 = vmatpush1.bf16.msra.mxu0 0
        %1833 = vmatprep.subr.bf16.mxu0 0
        %1834 = vmatpush1.bf16.msra.mxu0 0
        %1835 = vmatprep.subr.bf16.mxu0 0
        %1836 = vmatpush1.bf16.msra.mxu0 0
        %1837 = vmatprep.subr.bf16.mxu0 0
        %1838 = vmatpush1.bf16.msra.mxu0 %v1812
        %1839 = vmatprep.subr.bf16.mxu0 0
        %1840 = vmatpush1.bf16.msra.mxu0 %v1811
        %1841 = vmatprep.subr.bf16.mxu0 0
        %1842 = vmatpush1.bf16.msra.mxu0 %v1810
        %1843 = vmatprep.subr.bf16.mxu0 0
        %1844 = vmatpush1.bf16.msra.mxu0 %v1809
        %1845 = vmatprep.subr.bf16.mxu0 0
        %1846 = vmatpush2.bf16.msra.mxu0 0
        %1847 = vmatprep.subr.bf16.mxu0 0
        %1848 = vmatpush2.bf16.msra.mxu0 0
        %1849 = vmatprep.subr.bf16.mxu0 0
        %1850 = vmatpush2.bf16.msra.mxu0 0
        %1851 = vmatprep.subr.bf16.mxu0 0
        %1852 = vmatpush2.bf16.msra.mxu0 0
        %1853 = vmatprep.subr.bf16.mxu0 0
        %1854 = vmatpush2.bf16.msra.mxu0 0
        %1855 = vmatprep.subr.bf16.mxu0 0
        %1856 = vmatpush2.bf16.msra.mxu0 0
        %1857 = vmatprep.subr.bf16.mxu0 0
        %1858 = vmatpush2.bf16.msra.mxu0 0
        %1859 = vmatprep.subr.bf16.mxu0 0
        %1860 = vmatpush2.bf16.msra.mxu0 0
        %1861 = vmatprep.mubr.bf16.mxu0 0
        %1862 = vmatmul.mubr.bf16.gmra.mxu0 %v1818
        %v1863 = vpop.f32.mrf.mxu0
        %v1864 = vadd.f32 0.0, %v1863
        %v1865 = vpop.f32.mrf.mxu0
        %v1866 = vpop.f32.mrf.mxu0
        %v1867 = vadd.f32 0.0, %v1866
        %v1868 = vpop.f32.mrf.mxu0
        %1869 = vmatprep.mubr.bf16.mxu0 0
        %1870 = vmatmul.mubr.bf16.gmra.mxu0 %v1821
        %v1871 = vpop.f32.mrf.mxu0
        %v1872 = vadd.f32 0.0, %v1871
        %v1873 = vpop.f32.mrf.mxu0
        %v1874 = vpop.f32.mrf.mxu0
        %v1875 = vadd.f32 0.0, %v1874
        %v1876 = vpop.f32.mrf.mxu0
        %1877 = vmatprep.mubr.bf16.mxu0 0
        %1878 = vmatmul.mubr.bf16.gmra.mxu0 %v1824
        %v1879 = vpop.f32.mrf.mxu0
        %v1880 = vadd.f32 0.0, %v1879
        %v1881 = vpop.f32.mrf.mxu0
        %v1882 = vpop.f32.mrf.mxu0
        %v1883 = vadd.f32 0.0, %v1882
        %v1884 = vpop.f32.mrf.mxu0
        %1885 = vmatprep.mubr.bf16.mxu0 0
        %1886 = vmatmul.mubr.bf16.gmra.mxu0 %v1827
        %v1887 = vpop.f32.mrf.mxu0
        %v1888 = vadd.f32 0.0, %v1887
        %v1889 = vpop.f32.mrf.mxu0
        %v1890 = vpop.f32.mrf.mxu0
        %v1891 = vadd.f32 0.0, %v1890
        %v1892 = vpop.f32.mrf.mxu0
        %1893 = vdwg.mxu0
        %p1894 = scmp.eq.s32.totalorder %s25, 0
        // Predicated region
        $region37: #{forward.1} parent=35 // pred_check
          %p1895 = pneg %p1894
        $region38: #{forward.1} parent=35 // pred_check_branch
          %1897 = sbr.rel (%p1895) target = $region40
        $region39: #{forward.1} parent=35 // pred_region
          %v1898 = vld [vmem:[%s4] sm:$0x1]
          %v1900 = vlaneseq
          %v1901 = vshrl.u32 %v1900, 7
          %v1902 = vsub.s32 0, %v1901
          %v1903 = vrot.slane %v1898, %v1902
          %v1905 = vadd.f32 %v1864, %v1903
          %v1906 = vadd.f32 %v1867, %v1903
          %v1907 = vadd.f32 %v1872, %v1903
          %v1908 = vadd.f32 %v1875, %v1903
          %v1909 = vadd.f32 %v1880, %v1903
          %v1910 = vadd.f32 %v1883, %v1903
          %v1911 = vadd.f32 %v1888, %v1903
          %v1912 = vadd.f32 %v1891, %v1903
          %1913 = vst [vmem:[%s234] sm:$0xff] %v1905
          %1914 = vst [vmem:[%s234 + $0x8] sm:$0xff] %v1906
          %1915 = vst [vmem:[%s234 + $0x10] sm:$0xff] %v1907
          %1916 = vst [vmem:[%s234 + $0x18] sm:$0xff] %v1908
          %1917 = vst [vmem:[%s234 + $0x20] sm:$0xff] %v1909
          %1918 = vst [vmem:[%s234 + $0x28] sm:$0xff] %v1910
          %1919 = vst [vmem:[%s234 + $0x30] sm:$0xff] %v1911
          %1920 = vst [vmem:[%s234 + $0x38] sm:$0xff] %v1912
        $region40: #{forward.1} parent=35 // pred_fallthru
          _
        %p1921 = scmp.gt.s32.totalorder %s25, 0
        // Predicated region
        $region41: #{forward.1} parent=35 // pred_check
          %p1922 = pneg %p1921
        $region42: #{forward.1} parent=35 // pred_check_branch
          %1924 = sbr.rel (%p1922) target = $region44
        $region43: #{forward.1} parent=35 // pred_region
          %v1925 = vld [vmem:[%s234] sm:$0xff]
          %v1926 = vld [vmem:[%s234 + $0x8] sm:$0xff]
          %v1927 = vld [vmem:[%s234 + $0x10] sm:$0xff]
          %v1928 = vld [vmem:[%s234 + $0x18] sm:$0xff]
          %v1929 = vld [vmem:[%s234 + $0x20] sm:$0xff]
          %v1930 = vld [vmem:[%s234 + $0x28] sm:$0xff]
          %v1931 = vld [vmem:[%s234 + $0x30] sm:$0xff]
          %v1932 = vld [vmem:[%s234 + $0x38] sm:$0xff]
          %v1933 = vadd.f32 %v1925, %v1864
          %v1934 = vadd.f32 %v1926, %v1867
          %v1935 = vadd.f32 %v1927, %v1872
          %v1936 = vadd.f32 %v1928, %v1875
          %v1937 = vadd.f32 %v1929, %v1880
          %v1938 = vadd.f32 %v1930, %v1883
          %v1939 = vadd.f32 %v1931, %v1888
          %v1940 = vadd.f32 %v1932, %v1891
          %1941 = vst [vmem:[%s234] sm:$0xff] %v1933
          %1942 = vst [vmem:[%s234 + $0x8] sm:$0xff] %v1934
          %1943 = vst [vmem:[%s234 + $0x10] sm:$0xff] %v1935
          %1944 = vst [vmem:[%s234 + $0x18] sm:$0xff] %v1936
          %1945 = vst [vmem:[%s234 + $0x20] sm:$0xff] %v1937
          %1946 = vst [vmem:[%s234 + $0x28] sm:$0xff] %v1938
          %1947 = vst [vmem:[%s234 + $0x30] sm:$0xff] %v1939
          %1948 = vst [vmem:[%s234 + $0x38] sm:$0xff] %v1940
        $region44: #{forward.1} parent=35 // pred_fallthru
          _
        %s1949 = sand.u32 %s139, 1
        %s1950 = scalar_lea.sflag [#allocation5], %s1949
        %s1951 = sand.u32 %s139, 1
        %s1952 = smul.addr %s1951, 64
        %s1953 = scalar_lea.vmem [#allocation4], %s1952
        // Predicated region
        $region45: #{forward.1} parent=35 // pred_check
          %p1954 = pneg %p149
        $region46: #{forward.1} parent=35 // pred_check_branch
          %1956 = sbr.rel (%p1954) target = $region48
        $region47: #{forward.1} parent=35 // pred_region
          %s1958 = ssub.s32 1024, 1024
          %1959 = vsyncadd %s1950, %s1958
          %s1960 = smul.addr %s24, 8
          %s1961 = smul.addr %s1960, 128
          %s1962 = scalar_lea.hbm %s5, %s1961
          %s1963 = sshll.u32 %s1953, 4
          %s1964 = int_to_ptr.vmem [resolvable:$true] %s1963
          %1969 = dma.vmem_to_hbm [thread:$0]  %s1964, 1024, %s1962, %s1950, 128, 128, 8
        $region48: #{forward.1} parent=35 // pred_fallthru
          _
      $region36: #{forward.1} parent=5 // pred_fallthru
        _
      %p1970 = scmp.le.s32.totalorder 2, %s15
      // Predicated region
      $region49: #{forward.1} parent=5 // pred_check
        %p1971 = pneg %p1970
      $region50: #{forward.1} parent=5 // pred_check_branch
        %1973 = sbr.rel (%p1971) target = $region52
      $region51: #{forward.1} parent=5 // pred_region
        %s1974 = ssub.s32 %s15, 2
        // Predicated region
        $region53: #{forward.1} parent=51 // pred_check
          %p1975 = pneg %p155
        $region54: #{forward.1} parent=51 // pred_check_branch
          %1977 = sbr.rel (%p1975) target = $region56
        $region55: #{forward.1} parent=51 // pred_region
          %s1978 = sand.u32 %s140, 1
          %s1979 = scalar_lea.sflag [#allocation5], %s1978
          %s1980 = sand.u32 %s140, 1
          %s1981 = smul.addr %s1980, 64
          %s1982 = scalar_lea.vmem [#allocation4], %s1981
          %1983 = dma.done %s1979, 1024
        $region56: #{forward.1} parent=51 // pred_fallthru
          _
      $region52: #{forward.1} parent=5 // pred_fallthru
        _
    $region6: #{forward.1} parent=1 // loop_footer
      %s19 = sadd.s32 1, %s15
    $region7: #{forward.1} parent=1 // loop_footer_branch
      %14 = sbr.rel target = $region3
    $region8: #{forward.1} parent=1 // loop_exit
      _
    %1984 = vsyncpa [#allocation5], 1
    %s1985 = scalar_lea.sflag [#allocation5], 1
    %1986 = vsyncpa %s1985, 1

</llo_original>
